<compile_context>
chip_gen: v7x
topology: tpu7x:2x2x1
jax: 0.10.0
libtpu: 0.0.40
codegen_flags: <defaults>
</compile_context>

<pallas_src>
import jax
import jax.numpy as jnp
from jax import lax
from jax.experimental import pallas as pl
from jax.experimental.pallas import tpu as pltpu  # noqa: F401 (TPU backend)

# ---- model dimensions (small, self-consistent with the module's forward) ----
B = 2            # batch
S = 8            # sequence length
BS = B * S       # flattened rows in the residual stream
H = 32           # hidden size (d_model of LayerNormalization)
V = 64           # vocabulary size
VPAD = 128       # token-head output padded to a full lane width
NH = 2           # attention heads
DH = H // NH     # head dim
FF = 64          # feed-forward hidden
N_SEG = 2        # segment vocabulary
NEG_INF = -1e9
EPS = 1e-6       # LayerNormalization epsilon (torch spec default)


# --------------------------- shared math --------------------------------------

def _layernorm(x, gain, bias):
    """gain * (x - mean) / (std + eps) + bias, unbiased std (matches torch)."""
    mu = jnp.mean(x, axis=-1, keepdims=True)
    d = x - mu
    std = jnp.sqrt(jnp.sum(d * d, axis=-1, keepdims=True) * (1.0 / (H - 1)))
    return gain * d / (std + EPS) + bias


# --------------------------- Pallas kernel ------------------------------------

def bert_kernel(x_ref, mask_ref,
                wqkv_ref, bqkv_ref, wo_ref, bo_ref,
                g1_ref, be1_ref,
                w1_ref, b1_ref, w2_ref, b2_ref,
                g2_ref, be2_ref,
                wt_ref, bt_ref,
                tok_ref, cls_ref):
    """Fused encoder layer (both Sublayers) + token head for all batches."""
    x = x_ref[...]                  # (BS, H) residual stream, batch in sublanes
    mask = mask_ref[...]            # (BS, BS) block-diagonal additive mask
    wqkv = wqkv_ref[...]            # (H, 3H), 1/sqrt(DH) folded into Q columns
    bqkv = bqkv_ref[...]            # (1, 3H)
    wo = wo_ref[...]                # (H, H)
    bo = bo_ref[...]                # (1, H)
    g1, be1 = g1_ref[...], be1_ref[...]
    w1, b1 = w1_ref[...], b1_ref[...]
    w2, b2 = w2_ref[...], b2_ref[...]
    g2, be2 = g2_ref[...], be2_ref[...]
    wt, bt = wt_ref[...], bt_ref[...]   # (H, VPAD), (1, VPAD) lane-padded

    # ---- attention sublayer ----
    # Fused Q/K/V projection: one MXU push for the whole batch, 3H = 96 lanes.
    qkv = jnp.dot(x, wqkv, preferred_element_type=jnp.float32) + bqkv  # (BS, 3H)

    attn = None
    for h in range(NH):             # static unroll over heads (NH = 2)
        qh = qkv[:, h * DH:(h + 1) * DH]                      # (BS, DH)
        kh = qkv[:, H + h * DH:H + (h + 1) * DH]
        vh = qkv[:, 2 * H + h * DH:2 * H + (h + 1) * DH]
        # Batched scores: cross-batch / pad-key entries are killed by the
        # block-diagonal additive mask (exp(-1e9) underflows to exactly 0).
        scores = lax.dot_general(qh, kh, (((1,), (1,)), ((), ())),
                                 preferred_element_type=jnp.float32) + mask
        m = jnp.max(scores, axis=-1, keepdims=True)
        e = jnp.exp(scores - m)
        denom = jnp.sum(e, axis=-1, keepdims=True)            # (BS, 1)
        # Unnormalized context; normalize once on (BS, DH) via EUP reciprocal.
        ctx = jnp.dot(e, vh, preferred_element_type=jnp.float32)
        ctx = ctx * pl.reciprocal(denom, approx=True)
        # Fold head concatenation into the output projection: accumulate
        # through the matching row-slice of wo (static slice).
        part = jnp.dot(ctx, wo[h * DH:(h + 1) * DH, :],
                       preferred_element_type=jnp.float32)    # (BS, H)
        attn = part if attn is None else attn + part
    attn = attn + bo

    # Sublayer 1: residual + LayerNormalization (the spec'd module)
    x1 = _layernorm(x + attn, g1, be1)

    # ---- feed-forward sublayer (ReLU) ----
    hmid = jnp.maximum(
        jnp.dot(x1, w1, preferred_element_type=jnp.float32) + b1, 0.0)  # (BS, FF)
    ffn = jnp.dot(hmid, w2, preferred_element_type=jnp.float32) + b2    # (BS, H)

    # Sublayer 2: residual + LayerNormalization
    x2 = _layernorm(x1 + ffn, g2, be2)

    # Token head: lane-dense (BS, 128) store (V padded; sliced in wrapper).
    tok_ref[...] = jnp.dot(x2, wt, preferred_element_type=jnp.float32) + bt
    # CLS hidden states; the tiny (H, 2) classification matmul runs in XLA.
    for b in range(B):
        cls_ref[b] = x2[b * S:b * S + 1, :]


# --------------------------- wrappers ------------------------------------------

def encoder_heads_pallas(x_flat, mask2d, pp):
    tok_pad, cls_hidden = pl.pallas_call(
        bert_kernel,
        out_shape=(jax.ShapeDtypeStruct((BS, VPAD), jnp.float32),
                   jax.ShapeDtypeStruct((B, 1, H), jnp.float32)),
        # No grid / BlockSpecs: single invocation, full arrays staged in VMEM
        # (~70 KiB total) -> no per-grid-step pipeline overhead.
    )(x_flat, mask2d,
      pp["wqkv"], pp["bqkv"], pp["wo"], pp["bo"],
      pp["g1"], pp["be1"],
      pp["w1"], pp["b1"], pp["w2"], pp["b2"],
      pp["g2"], pp["be2"],
      pp["wt"], pp["bt"])
    return tok_pad, cls_hidden


def bert_forward(sequence, segment, pp):
    # ---- embeddings (glue: gathers stay in JAX/XLA) ----
    token_emb = pp["tok_table"][sequence]                    # (B, S, H)
    pos_emb = pp["pos_table"][jnp.arange(S)][None, :, :]     # (1, S, H)
    pos_emb = jnp.broadcast_to(pos_emb, (B, S, H))
    seg_emb = pp["seg_table"][segment]                       # (B, S, H)
    embedded = (token_emb + pos_emb + seg_emb).astype(jnp.float32)
    x_flat = embedded.reshape(BS, H)                         # batch -> sublanes

    # ---- combined additive mask (pad-key mask + block-diagonal batch mask) ----
    key_mask = jnp.where(sequence == 0, NEG_INF, 0.0).astype(jnp.float32)  # (B, S)
    batch_ids = jnp.repeat(jnp.arange(B), S)                               # (BS,)
    same_batch = batch_ids[:, None] == batch_ids[None, :]                  # (BS, BS)
    mask2d = jnp.where(same_batch, key_mask.reshape(BS)[None, :], NEG_INF)
    mask2d = mask2d.astype(jnp.float32)

    # ---- fused encoder + token head (Pallas) ----
    tok_pad, cls_hidden = encoder_heads_pallas(x_flat, mask2d, pp)
    token_predictions = tok_pad.reshape(B, S, VPAD)[:, :, :V]   # drop lane padding
    classification_output = cls_hidden[:, 0, :] @ pp["wc"] + pp["bc"]  # (B, 2)
    return token_predictions, classification_output


# --------------------------- parameter prep ------------------------------------

def prepare_params(p):
    """One-time parameter transforms done outside the kernel."""
    scale = 1.0 / (DH ** 0.5)
    wqkv = jnp.concatenate([p["wq"] * scale, p["wk"], p["wv"]], axis=1)  # (H, 3H)
    bqkv = jnp.concatenate([p["bq"] * scale, p["bk"], p["bv"]], axis=1)  # (1, 3H)
    wt_pad = jnp.zeros((H, VPAD), jnp.float32).at[:, :V].set(p["wt"])
    bt_pad = jnp.zeros((1, VPAD), jnp.float32).at[:, :V].set(p["bt"])
    return {
        "tok_table": p["tok_table"], "pos_table": p["pos_table"],
        "seg_table": p["seg_table"],
        "wqkv": wqkv, "bqkv": bqkv,
        "wo": p["wo"], "bo": p["bo"],
        "g1": p["g1"], "be1": p["be1"],
        "w1": p["w1"], "b1": p["b1"], "w2": p["w2"], "b2": p["b2"],
        "g2": p["g2"], "be2": p["be2"],
        "wt": wt_pad, "bt": bt_pad,
        "wc": p["wc"], "bc": p["bc"],
    }


# --------------------------- reference (pure JAX, f32) --------------------------

def bert_forward_ref(sequence, segment, p):
    token_emb = p["tok_table"][sequence]
    pos_emb = jnp.broadcast_to(p["pos_table"][jnp.arange(S)][None], (B, S, H))
    seg_emb = p["seg_table"][segment]
    x = (token_emb + pos_emb + seg_emb).astype(jnp.float32)
    pad = (sequence == 0)[:, None, :]
    mask_add = jnp.where(pad, NEG_INF, 0.0).astype(jnp.float32)

    def one(xb, mb):
        q = xb @ p["wq"] + p["bq"]
        k = xb @ p["wk"] + p["bk"]
        v = xb @ p["wv"] + p["bv"]
        outs = []
        for h in range(NH):
            qh, kh, vh = (t[:, h * DH:(h + 1) * DH] for t in (q, k, v))
            s = (qh @ kh.T) * (1.0 / (DH ** 0.5)) + mb
            s = s - jnp.max(s, axis=-1, keepdims=True)
            e = jnp.exp(s)
            pw = e / jnp.sum(e, axis=-1, keepdims=True)
            outs.append(pw @ vh)
        ctx = jnp.concatenate(outs, axis=-1)
        a = ctx @ p["wo"] + p["bo"]
        x1 = _layernorm(xb + a, p["g1"], p["be1"])
        f = jnp.maximum(x1 @ p["w1"] + p["b1"], 0.0) @ p["w2"] + p["b2"]
        return _layernorm(x1 + f, p["g2"], p["be2"])

    enc = jnp.stack([one(x[b], mask_add[b]) for b in range(B)])
    tok = enc @ p["wt"] + p["bt"]
    cls = enc[:, 0, :] @ p["wc"] + p["bc"]
    return tok, cls


# --------------------------- parameter init -------------------------------------

def init_params(key):
    ks = jax.random.split(key, 16)
    n = lambda k, s: (0.02 * jax.random.normal(k, s)).astype(jnp.float32)
    return {
        "tok_table": n(ks[0], (V, H)),
        "pos_table": n(ks[1], (S, H)),
        "seg_table": n(ks[2], (N_SEG, H)),
        "wq": n(ks[3], (H, H)), "bq": jnp.zeros((1, H), jnp.float32),
        "wk": n(ks[4], (H, H)), "bk": jnp.zeros((1, H), jnp.float32),
        "wv": n(ks[5], (H, H)), "bv": jnp.zeros((1, H), jnp.float32),
        "wo": n(ks[6], (H, H)), "bo": jnp.zeros((1, H), jnp.float32),
        "g1": jnp.ones((1, H), jnp.float32), "be1": jnp.zeros((1, H), jnp.float32),
        "w1": n(ks[7], (H, FF)), "b1": jnp.zeros((1, FF), jnp.float32),
        "w2": n(ks[8], (FF, H)), "b2": jnp.zeros((1, H), jnp.float32),
        "g2": jnp.ones((1, H), jnp.float32), "be2": jnp.zeros((1, H), jnp.float32),
        "wt": n(ks[9], (H, V)), "bt": jnp.zeros((1, V), jnp.float32),
        "wc": n(ks[10], (H, 2)), "bc": jnp.zeros((1, 2), jnp.float32),
    }


# --------------------------- main ------------------------------------------------

if __name__ == "__main__":
    key = jax.random.PRNGKey(0)
    kp, kseq, kseg = jax.random.split(key, 3)
    params = init_params(kp)
    prepped = prepare_params(params)     # one-time, outside the kernel / jit

    sequence = jax.random.randint(kseq, (B, S), 1, V).astype(jnp.int32)
    sequence = sequence.at[:, -2:].set(0)            # pad tokens -> exercises mask
    segment = jax.random.randint(kseg, (B, S), 0, N_SEG).astype(jnp.int32)

    tok_pred, cls_out = jax.jit(bert_forward)(sequence, segment, prepped)
    jax.block_until_ready((tok_pred, cls_out))

    tok_ref, cls_ref_out = bert_forward_ref(sequence, segment, params)
    assert tok_pred.shape == (B, S, V) and cls_out.shape == (B, 2)
    assert jnp.allclose(tok_pred, tok_ref, rtol=1e-3, atol=1e-3), \
        float(jnp.max(jnp.abs(tok_pred - tok_ref)))
    assert jnp.allclose(cls_out, cls_ref_out, rtol=1e-3, atol=1e-3), \
        float(jnp.max(jnp.abs(cls_out - cls_ref_out)))

    print("KERNEL_OK")
</pallas_src>

<mosaic_0001>
module attributes {stable_mosaic.version = 11 : i64} {
  func.func @bert_kernel(%arg0: memref<16x32xf32, #tpu.memory_space<vmem>>, %arg1: memref<16x16xf32, #tpu.memory_space<vmem>>, %arg2: memref<32x96xf32, #tpu.memory_space<vmem>>, %arg3: memref<1x96xf32, #tpu.memory_space<vmem>>, %arg4: memref<32x32xf32, #tpu.memory_space<vmem>>, %arg5: memref<1x32xf32, #tpu.memory_space<vmem>>, %arg6: memref<1x32xf32, #tpu.memory_space<vmem>>, %arg7: memref<1x32xf32, #tpu.memory_space<vmem>>, %arg8: memref<32x64xf32, #tpu.memory_space<vmem>>, %arg9: memref<1x64xf32, #tpu.memory_space<vmem>>, %arg10: memref<64x32xf32, #tpu.memory_space<vmem>>, %arg11: memref<1x32xf32, #tpu.memory_space<vmem>>, %arg12: memref<1x32xf32, #tpu.memory_space<vmem>>, %arg13: memref<1x32xf32, #tpu.memory_space<vmem>>, %arg14: memref<32x128xf32, #tpu.memory_space<vmem>>, %arg15: memref<1x128xf32, #tpu.memory_space<vmem>>, %arg16: memref<16x128xf32, #tpu.memory_space<vmem>>, %arg17: memref<2x1x32xf32, #tpu.memory_space<vmem>>) attributes {dimension_semantics = [], scalar_prefetch = 0 : i64, scratch_operands = 0 : i64, tpu.core_type = #tpu.core_type<tc>} {
    %c0 = arith.constant 0 : index
    %c0_0 = arith.constant 0 : index
    %0 = vector.load %arg0[%c0, %c0_0] : memref<16x32xf32, #tpu.memory_space<vmem>>, vector<16x32xf32>
    %c0_1 = arith.constant 0 : index
    %c0_2 = arith.constant 0 : index
    %1 = vector.load %arg1[%c0_1, %c0_2] : memref<16x16xf32, #tpu.memory_space<vmem>>, vector<16x16xf32>
    %c0_3 = arith.constant 0 : index
    %c0_4 = arith.constant 0 : index
    %2 = vector.load %arg2[%c0_3, %c0_4] : memref<32x96xf32, #tpu.memory_space<vmem>>, vector<32x96xf32>
    %c0_5 = arith.constant 0 : index
    %c0_6 = arith.constant 0 : index
    %3 = vector.load %arg3[%c0_5, %c0_6] : memref<1x96xf32, #tpu.memory_space<vmem>>, vector<1x96xf32>
    %c0_7 = arith.constant 0 : index
    %c0_8 = arith.constant 0 : index
    %4 = vector.load %arg4[%c0_7, %c0_8] : memref<32x32xf32, #tpu.memory_space<vmem>>, vector<32x32xf32>
    %c0_9 = arith.constant 0 : index
    %c0_10 = arith.constant 0 : index
    %5 = vector.load %arg5[%c0_9, %c0_10] : memref<1x32xf32, #tpu.memory_space<vmem>>, vector<1x32xf32>
    %c0_11 = arith.constant 0 : index
    %c0_12 = arith.constant 0 : index
    %6 = vector.load %arg6[%c0_11, %c0_12] : memref<1x32xf32, #tpu.memory_space<vmem>>, vector<1x32xf32>
    %c0_13 = arith.constant 0 : index
    %c0_14 = arith.constant 0 : index
    %7 = vector.load %arg7[%c0_13, %c0_14] : memref<1x32xf32, #tpu.memory_space<vmem>>, vector<1x32xf32>
    %c0_15 = arith.constant 0 : index
    %c0_16 = arith.constant 0 : index
    %8 = vector.load %arg8[%c0_15, %c0_16] : memref<32x64xf32, #tpu.memory_space<vmem>>, vector<32x64xf32>
    %c0_17 = arith.constant 0 : index
    %c0_18 = arith.constant 0 : index
    %9 = vector.load %arg9[%c0_17, %c0_18] : memref<1x64xf32, #tpu.memory_space<vmem>>, vector<1x64xf32>
    %c0_19 = arith.constant 0 : index
    %c0_20 = arith.constant 0 : index
    %10 = vector.load %arg10[%c0_19, %c0_20] : memref<64x32xf32, #tpu.memory_space<vmem>>, vector<64x32xf32>
    %c0_21 = arith.constant 0 : index
    %c0_22 = arith.constant 0 : index
    %11 = vector.load %arg11[%c0_21, %c0_22] : memref<1x32xf32, #tpu.memory_space<vmem>>, vector<1x32xf32>
    %c0_23 = arith.constant 0 : index
    %c0_24 = arith.constant 0 : index
    %12 = vector.load %arg12[%c0_23, %c0_24] : memref<1x32xf32, #tpu.memory_space<vmem>>, vector<1x32xf32>
    %c0_25 = arith.constant 0 : index
    %c0_26 = arith.constant 0 : index
    %13 = vector.load %arg13[%c0_25, %c0_26] : memref<1x32xf32, #tpu.memory_space<vmem>>, vector<1x32xf32>
    %c0_27 = arith.constant 0 : index
    %c0_28 = arith.constant 0 : index
    %14 = vector.load %arg14[%c0_27, %c0_28] : memref<32x128xf32, #tpu.memory_space<vmem>>, vector<32x128xf32>
    %c0_29 = arith.constant 0 : index
    %c0_30 = arith.constant 0 : index
    %15 = vector.load %arg15[%c0_29, %c0_30] : memref<1x128xf32, #tpu.memory_space<vmem>>, vector<1x128xf32>
    %cst = arith.constant dense<0.000000e+00> : vector<16x96xf32>
    %16 = tpu.matmul %0, %2, %cst {dimension_numbers = #tpu.dot_dimension_numbers<[1], [0], [0], [1], [0, 0, 1, 1], [], []>} : vector<16x32xf32>, vector<32x96xf32>, vector<16x96xf32> -> vector<16x96xf32>
    %17 = vector.broadcast %3 : vector<1x96xf32> to vector<16x96xf32>
    %18 = arith.addf %16, %17 : vector<16x96xf32>
    %19 = vector.extract_strided_slice %18 {offsets = [0, 0], sizes = [16, 16], strides = [1, 1]} : vector<16x96xf32> to vector<16x16xf32>
    %20 = vector.extract_strided_slice %18 {offsets = [0, 32], sizes = [16, 16], strides = [1, 1]} : vector<16x96xf32> to vector<16x16xf32>
    %21 = vector.extract_strided_slice %18 {offsets = [0, 64], sizes = [16, 16], strides = [1, 1]} : vector<16x96xf32> to vector<16x16xf32>
    %cst_31 = arith.constant dense<0.000000e+00> : vector<16x16xf32>
    %22 = tpu.matmul %19, %20, %cst_31 {dimension_numbers = #tpu.dot_dimension_numbers<[1], [1], [0], [0], [0, 0, 1, 0], [], []>} : vector<16x16xf32>, vector<16x16xf32>, vector<16x16xf32> -> vector<16x16xf32>
    %23 = arith.addf %22, %1 : vector<16x16xf32>
    %cst_32 = arith.constant dense<0xFF800000> : vector<16xf32>
    %24 = vector.multi_reduction <maximumf>, %23, %cst_32 [1] : vector<16x16xf32> to vector<16xf32>
    %25 = vector.shape_cast %24 : vector<16xf32> to vector<16x1xf32>
    %26 = vector.broadcast %25 : vector<16x1xf32> to vector<16x16xf32>
    %27 = arith.subf %23, %26 : vector<16x16xf32>
    %28 = math.exp %27 : vector<16x16xf32>
    %cst_33 = arith.constant dense<0.000000e+00> : vector<16xf32>
    %29 = vector.multi_reduction <add>, %28, %cst_33 [1] : vector<16x16xf32> to vector<16xf32>
    %30 = vector.shape_cast %29 : vector<16xf32> to vector<16x1xf32>
    %cst_34 = arith.constant dense<0.000000e+00> : vector<16x16xf32>
    %31 = tpu.matmul %28, %21, %cst_34 {dimension_numbers = #tpu.dot_dimension_numbers<[1], [0], [0], [1], [0, 0, 1, 1], [], []>} : vector<16x16xf32>, vector<16x16xf32>, vector<16x16xf32> -> vector<16x16xf32>
    %32 = tpu.reciprocal %30 {approx = true} : vector<16x1xf32> -> vector<16x1xf32>
    %33 = vector.broadcast %32 : vector<16x1xf32> to vector<16x16xf32>
    %34 = arith.mulf %31, %33 : vector<16x16xf32>
    %35 = vector.extract_strided_slice %4 {offsets = [0, 0], sizes = [16, 32], strides = [1, 1]} : vector<32x32xf32> to vector<16x32xf32>
    %cst_35 = arith.constant dense<0.000000e+00> : vector<16x32xf32>
    %36 = tpu.matmul %34, %35, %cst_35 {dimension_numbers = #tpu.dot_dimension_numbers<[1], [0], [0], [1], [0, 0, 1, 1], [], []>} : vector<16x16xf32>, vector<16x32xf32>, vector<16x32xf32> -> vector<16x32xf32>
    %37 = vector.extract_strided_slice %18 {offsets = [0, 16], sizes = [16, 16], strides = [1, 1]} : vector<16x96xf32> to vector<16x16xf32>
    %38 = vector.extract_strided_slice %18 {offsets = [0, 48], sizes = [16, 16], strides = [1, 1]} : vector<16x96xf32> to vector<16x16xf32>
    %39 = vector.extract_strided_slice %18 {offsets = [0, 80], sizes = [16, 16], strides = [1, 1]} : vector<16x96xf32> to vector<16x16xf32>
    %cst_36 = arith.constant dense<0.000000e+00> : vector<16x16xf32>
    %40 = tpu.matmul %37, %38, %cst_36 {dimension_numbers = #tpu.dot_dimension_numbers<[1], [1], [0], [0], [0, 0, 1, 0], [], []>} : vector<16x16xf32>, vector<16x16xf32>, vector<16x16xf32> -> vector<16x16xf32>
    %41 = arith.addf %40, %1 : vector<16x16xf32>
    %cst_37 = arith.constant dense<0xFF800000> : vector<16xf32>
    %42 = vector.multi_reduction <maximumf>, %41, %cst_37 [1] : vector<16x16xf32> to vector<16xf32>
    %43 = vector.shape_cast %42 : vector<16xf32> to vector<16x1xf32>
    %44 = vector.broadcast %43 : vector<16x1xf32> to vector<16x16xf32>
    %45 = arith.subf %41, %44 : vector<16x16xf32>
    %46 = math.exp %45 : vector<16x16xf32>
    %cst_38 = arith.constant dense<0.000000e+00> : vector<16xf32>
    %47 = vector.multi_reduction <add>, %46, %cst_38 [1] : vector<16x16xf32> to vector<16xf32>
    %48 = vector.shape_cast %47 : vector<16xf32> to vector<16x1xf32>
    %cst_39 = arith.constant dense<0.000000e+00> : vector<16x16xf32>
    %49 = tpu.matmul %46, %39, %cst_39 {dimension_numbers = #tpu.dot_dimension_numbers<[1], [0], [0], [1], [0, 0, 1, 1], [], []>} : vector<16x16xf32>, vector<16x16xf32>, vector<16x16xf32> -> vector<16x16xf32>
    %50 = tpu.reciprocal %48 {approx = true} : vector<16x1xf32> -> vector<16x1xf32>
    %51 = vector.broadcast %50 : vector<16x1xf32> to vector<16x16xf32>
    %52 = arith.mulf %49, %51 : vector<16x16xf32>
    %53 = vector.extract_strided_slice %4 {offsets = [16, 0], sizes = [16, 32], strides = [1, 1]} : vector<32x32xf32> to vector<16x32xf32>
    %cst_40 = arith.constant dense<0.000000e+00> : vector<16x32xf32>
    %54 = tpu.matmul %52, %53, %cst_40 {dimension_numbers = #tpu.dot_dimension_numbers<[1], [0], [0], [1], [0, 0, 1, 1], [], []>} : vector<16x16xf32>, vector<16x32xf32>, vector<16x32xf32> -> vector<16x32xf32>
    %55 = arith.addf %36, %54 : vector<16x32xf32>
    %56 = vector.broadcast %5 : vector<1x32xf32> to vector<16x32xf32>
    %57 = arith.addf %55, %56 : vector<16x32xf32>
    %58 = arith.addf %0, %57 : vector<16x32xf32>
    %cst_41 = arith.constant dense<0.000000e+00> : vector<16xf32>
    %59 = vector.multi_reduction <add>, %58, %cst_41 [1] : vector<16x32xf32> to vector<16xf32>
    %60 = vector.shape_cast %59 : vector<16xf32> to vector<16x1xf32>
    %cst_42 = arith.constant 3.200000e+01 : f32
    %61 = vector.broadcast %cst_42 : f32 to vector<16x1xf32>
    %62 = arith.divf %60, %61 : vector<16x1xf32>
    %63 = vector.broadcast %62 : vector<16x1xf32> to vector<16x32xf32>
    %64 = arith.subf %58, %63 : vector<16x32xf32>
    %65 = arith.mulf %64, %64 : vector<16x32xf32>
    %cst_43 = arith.constant dense<0.000000e+00> : vector<16xf32>
    %66 = vector.multi_reduction <add>, %65, %cst_43 [1] : vector<16x32xf32> to vector<16xf32>
    %67 = vector.shape_cast %66 : vector<16xf32> to vector<16x1xf32>
    %cst_44 = arith.constant 0.0322580636 : f32
    %68 = vector.broadcast %cst_44 : f32 to vector<16x1xf32>
    %69 = arith.mulf %67, %68 : vector<16x1xf32>
    %70 = math.sqrt %69 : vector<16x1xf32>
    %71 = vector.broadcast %6 : vector<1x32xf32> to vector<16x32xf32>
    %72 = arith.mulf %71, %64 : vector<16x32xf32>
    %cst_45 = arith.constant 9.99999997E-7 : f32
    %73 = vector.broadcast %cst_45 : f32 to vector<16x1xf32>
    %74 = arith.addf %70, %73 : vector<16x1xf32>
    %75 = vector.broadcast %74 : vector<16x1xf32> to vector<16x32xf32>
    %76 = arith.divf %72, %75 : vector<16x32xf32>
    %77 = vector.broadcast %7 : vector<1x32xf32> to vector<16x32xf32>
    %78 = arith.addf %76, %77 : vector<16x32xf32>
    %cst_46 = arith.constant dense<0.000000e+00> : vector<16x64xf32>
    %79 = tpu.matmul %78, %8, %cst_46 {dimension_numbers = #tpu.dot_dimension_numbers<[1], [0], [0], [1], [0, 0, 1, 1], [], []>} : vector<16x32xf32>, vector<32x64xf32>, vector<16x64xf32> -> vector<16x64xf32>
    %80 = vector.broadcast %9 : vector<1x64xf32> to vector<16x64xf32>
    %81 = arith.addf %79, %80 : vector<16x64xf32>
    %cst_47 = arith.constant 0.000000e+00 : f32
    %82 = vector.broadcast %cst_47 : f32 to vector<16x64xf32>
    %83 = arith.maximumf %81, %82 : vector<16x64xf32>
    %cst_48 = arith.constant dense<0.000000e+00> : vector<16x32xf32>
    %84 = tpu.matmul %83, %10, %cst_48 {dimension_numbers = #tpu.dot_dimension_numbers<[1], [0], [0], [1], [0, 0, 1, 1], [], []>} : vector<16x64xf32>, vector<64x32xf32>, vector<16x32xf32> -> vector<16x32xf32>
    %85 = vector.broadcast %11 : vector<1x32xf32> to vector<16x32xf32>
    %86 = arith.addf %84, %85 : vector<16x32xf32>
    %87 = arith.addf %78, %86 : vector<16x32xf32>
    %cst_49 = arith.constant dense<0.000000e+00> : vector<16xf32>
    %88 = vector.multi_reduction <add>, %87, %cst_49 [1] : vector<16x32xf32> to vector<16xf32>
    %89 = vector.shape_cast %88 : vector<16xf32> to vector<16x1xf32>
    %cst_50 = arith.constant 3.200000e+01 : f32
    %90 = vector.broadcast %cst_50 : f32 to vector<16x1xf32>
    %91 = arith.divf %89, %90 : vector<16x1xf32>
    %92 = vector.broadcast %91 : vector<16x1xf32> to vector<16x32xf32>
    %93 = arith.subf %87, %92 : vector<16x32xf32>
    %94 = arith.mulf %93, %93 : vector<16x32xf32>
    %cst_51 = arith.constant dense<0.000000e+00> : vector<16xf32>
    %95 = vector.multi_reduction <add>, %94, %cst_51 [1] : vector<16x32xf32> to vector<16xf32>
    %96 = vector.shape_cast %95 : vector<16xf32> to vector<16x1xf32>
    %cst_52 = arith.constant 0.0322580636 : f32
    %97 = vector.broadcast %cst_52 : f32 to vector<16x1xf32>
    %98 = arith.mulf %96, %97 : vector<16x1xf32>
    %99 = math.sqrt %98 : vector<16x1xf32>
    %100 = vector.broadcast %12 : vector<1x32xf32> to vector<16x32xf32>
    %101 = arith.mulf %100, %93 : vector<16x32xf32>
    %cst_53 = arith.constant 9.99999997E-7 : f32
    %102 = vector.broadcast %cst_53 : f32 to vector<16x1xf32>
    %103 = arith.addf %99, %102 : vector<16x1xf32>
    %104 = vector.broadcast %103 : vector<16x1xf32> to vector<16x32xf32>
    %105 = arith.divf %101, %104 : vector<16x32xf32>
    %106 = vector.broadcast %13 : vector<1x32xf32> to vector<16x32xf32>
    %107 = arith.addf %105, %106 : vector<16x32xf32>
    %cst_54 = arith.constant dense<0.000000e+00> : vector<16x128xf32>
    %108 = tpu.matmul %107, %14, %cst_54 {dimension_numbers = #tpu.dot_dimension_numbers<[1], [0], [0], [1], [0, 0, 1, 1], [], []>} : vector<16x32xf32>, vector<32x128xf32>, vector<16x128xf32> -> vector<16x128xf32>
    %109 = vector.broadcast %15 : vector<1x128xf32> to vector<16x128xf32>
    %110 = arith.addf %108, %109 : vector<16x128xf32>
    %c0_55 = arith.constant 0 : index
    %c0_56 = arith.constant 0 : index
    %111 = vector.load %arg16[%c0_55, %c0_56] : memref<16x128xf32, #tpu.memory_space<vmem>>, vector<16x128xf32>
    tpu.vector_store %arg16[%c0_55, %c0_56], %110 {strides = array<i32>} : memref<16x128xf32, #tpu.memory_space<vmem>>, vector<16x128xf32>,
    %112 = vector.extract_strided_slice %107 {offsets = [0, 0], sizes = [1, 32], strides = [1, 1]} : vector<16x32xf32> to vector<1x32xf32>
    %c0_57 = arith.constant 0 : index
    %c0_58 = arith.constant 0 : index
    %c0_59 = arith.constant 0 : index
    %113 = vector.load %arg17[%c0_57, %c0_58, %c0_59] : memref<2x1x32xf32, #tpu.memory_space<vmem>>, vector<1x1x32xf32>
    %114 = vector.shape_cast %113 : vector<1x1x32xf32> to vector<1x32xf32>
    %115 = vector.shape_cast %112 : vector<1x32xf32> to vector<1x1x32xf32>
    tpu.vector_store %arg17[%c0_57, %c0_58, %c0_59], %115 {strides = array<i32>} : memref<2x1x32xf32, #tpu.memory_space<vmem>>, vector<1x1x32xf32>,
    %116 = vector.extract_strided_slice %107 {offsets = [8, 0], sizes = [1, 32], strides = [1, 1]} : vector<16x32xf32> to vector<1x32xf32>
    %c1 = arith.constant 1 : index
    %c0_60 = arith.constant 0 : index
    %c0_61 = arith.constant 0 : index
    %117 = vector.load %arg17[%c1, %c0_60, %c0_61] : memref<2x1x32xf32, #tpu.memory_space<vmem>>, vector<1x1x32xf32>
    %118 = vector.shape_cast %117 : vector<1x1x32xf32> to vector<1x32xf32>
    %119 = vector.shape_cast %116 : vector<1x32xf32> to vector<1x1x32xf32>
    tpu.vector_store %arg17[%c1, %c0_60, %c0_61], %119 {strides = array<i32>} : memref<2x1x32xf32, #tpu.memory_space<vmem>>, vector<1x1x32xf32>,
    return
  }
}

</mosaic_0001>

<llo_original>
// kernel: bert_forward.1
$region0: #{bert_forward.1}
  #allocation0 [shape = 'u32[]', space=smem, size = 0x4, offset = 0x4, fixed_abs, tag = 'smem constant byte address 0x4 - core index']
  #allocation1 [shape = 'u32[144,128]{1,0:T(1,128)}', space=vmem, size = 0x12000, scoped, tag = 'internal scratch']
  %s0 = inlined_call_operand.vmem [shape: f32[16,32], index: 0, kind: input, shape index: {}]
  %s1 = inlined_call_operand.vmem [shape: f32[16,16], index: 1, kind: input, shape index: {}]
  %s2 = inlined_call_operand.vmem [shape: f32[32,96], index: 2, kind: input, shape index: {}]
  %s3 = inlined_call_operand.vmem [shape: f32[1,96], index: 3, kind: input, shape index: {}]
  %s4 = inlined_call_operand.vmem [shape: f32[32,32], index: 4, kind: input, shape index: {}]
  %s5 = inlined_call_operand.vmem [shape: f32[1,32], index: 5, kind: input, shape index: {}]
  %s6 = inlined_call_operand.vmem [shape: f32[1,32], index: 6, kind: input, shape index: {}]
  %s7 = inlined_call_operand.vmem [shape: f32[1,32], index: 7, kind: input, shape index: {}]
  %s8 = inlined_call_operand.vmem [shape: f32[32,64], index: 8, kind: input, shape index: {}]
  %s9 = inlined_call_operand.vmem [shape: f32[1,64], index: 9, kind: input, shape index: {}]
  %s10 = inlined_call_operand.vmem [shape: f32[64,32], index: 10, kind: input, shape index: {}]
  %s11 = inlined_call_operand.vmem [shape: f32[1,32], index: 11, kind: input, shape index: {}]
  %s12 = inlined_call_operand.vmem [shape: f32[1,32], index: 12, kind: input, shape index: {}]
  %s13 = inlined_call_operand.vmem [shape: f32[1,32], index: 13, kind: input, shape index: {}]
  %s14 = inlined_call_operand.vmem [shape: f32[32,128], index: 14, kind: input, shape index: {}]
  %s15 = inlined_call_operand.vmem [shape: f32[1,128], index: 15, kind: input, shape index: {}]
  %s16 = inlined_call_operand.hbm [shape: f32[16,128], index: 16, kind: output, shape index: {0}]
  %s17 = inlined_call_operand.vmem [shape: f32[2,1,32], index: 17, kind: output, shape index: {1}]
  %18 = xla_tuple %s16, %s17
  %s19 = sld [smem:[#allocation0]]
  $region82: #{bert_forward.1} parent=0
    _
  %s21 = ssub.s32 1, %s19
  %s22 = scalar_select 0, %s21, %s19
  $region1: #{bert_forward.1} parent=0
    #allocation2 [shape = 'u8[8192]{0}', space=vmem, size = 0x2000, scoped, tag = 'output window, operand 0, single buffered']
    #allocation3 [shape = 's32[1]{0}', space=sflag, size = 0x4, scoped, tag = 'scoped memory for bert_forward.1']
    %23 = vsyncpa [#allocation3], 0
    // Predicated region
    $region2: #{bert_forward.1} parent=1 // pred_check
      _
    $region3: #{bert_forward.1} parent=1 // pred_check_branch
      %25 = sbr.rel (0) target = $region5
    $region4: #{bert_forward.1} parent=1 // pred_region
      _
    $region5: #{bert_forward.1} parent=1 // pred_fallthru
      _
    // Predicated region
    $region6: #{bert_forward.1} parent=1 // pred_check
      _
    $region7: #{bert_forward.1} parent=1 // pred_check_branch
      %27 = sbr.rel (0) target = $region9
    $region8: #{bert_forward.1} parent=1 // pred_region
      _
    $region9: #{bert_forward.1} parent=1 // pred_fallthru
      _
    // Predicated region
    $region10: #{bert_forward.1} parent=1 // pred_check
      _
    $region11: #{bert_forward.1} parent=1 // pred_check_branch
      %29 = sbr.rel (0) target = $region13
    $region12: #{bert_forward.1} parent=1 // pred_region
      _
    $region13: #{bert_forward.1} parent=1 // pred_fallthru
      _
    // Predicated region
    $region14: #{bert_forward.1} parent=1 // pred_check
      _
    $region15: #{bert_forward.1} parent=1 // pred_check_branch
      %31 = sbr.rel (0) target = $region17
    $region16: #{bert_forward.1} parent=1 // pred_region
      _
    $region17: #{bert_forward.1} parent=1 // pred_fallthru
      _
    // Predicated region
    $region18: #{bert_forward.1} parent=1 // pred_check
      _
    $region19: #{bert_forward.1} parent=1 // pred_check_branch
      %33 = sbr.rel (0) target = $region21
    $region20: #{bert_forward.1} parent=1 // pred_region
      _
    $region21: #{bert_forward.1} parent=1 // pred_fallthru
      _
    // Predicated region
    $region22: #{bert_forward.1} parent=1 // pred_check
      _
    $region23: #{bert_forward.1} parent=1 // pred_check_branch
      %35 = sbr.rel (0) target = $region25
    $region24: #{bert_forward.1} parent=1 // pred_region
      _
    $region25: #{bert_forward.1} parent=1 // pred_fallthru
      _
    // Predicated region
    $region26: #{bert_forward.1} parent=1 // pred_check
      _
    $region27: #{bert_forward.1} parent=1 // pred_check_branch
      %37 = sbr.rel (0) target = $region29
    $region28: #{bert_forward.1} parent=1 // pred_region
      _
    $region29: #{bert_forward.1} parent=1 // pred_fallthru
      _
    // Predicated region
    $region30: #{bert_forward.1} parent=1 // pred_check
      _
    $region31: #{bert_forward.1} parent=1 // pred_check_branch
      %39 = sbr.rel (0) target = $region33
    $region32: #{bert_forward.1} parent=1 // pred_region
      _
    $region33: #{bert_forward.1} parent=1 // pred_fallthru
      _
    // Predicated region
    $region34: #{bert_forward.1} parent=1 // pred_check
      _
    $region35: #{bert_forward.1} parent=1 // pred_check_branch
      %41 = sbr.rel (0) target = $region37
    $region36: #{bert_forward.1} parent=1 // pred_region
      _
    $region37: #{bert_forward.1} parent=1 // pred_fallthru
      _
    // Predicated region
    $region38: #{bert_forward.1} parent=1 // pred_check
      _
    $region39: #{bert_forward.1} parent=1 // pred_check_branch
      %43 = sbr.rel (0) target = $region41
    $region40: #{bert_forward.1} parent=1 // pred_region
      _
    $region41: #{bert_forward.1} parent=1 // pred_fallthru
      _
    // Predicated region
    $region42: #{bert_forward.1} parent=1 // pred_check
      _
    $region43: #{bert_forward.1} parent=1 // pred_check_branch
      %45 = sbr.rel (0) target = $region45
    $region44: #{bert_forward.1} parent=1 // pred_region
      _
    $region45: #{bert_forward.1} parent=1 // pred_fallthru
      _
    // Predicated region
    $region46: #{bert_forward.1} parent=1 // pred_check
      _
    $region47: #{bert_forward.1} parent=1 // pred_check_branch
      %47 = sbr.rel (0) target = $region49
    $region48: #{bert_forward.1} parent=1 // pred_region
      _
    $region49: #{bert_forward.1} parent=1 // pred_fallthru
      _
    // Predicated region
    $region50: #{bert_forward.1} parent=1 // pred_check
      _
    $region51: #{bert_forward.1} parent=1 // pred_check_branch
      %49 = sbr.rel (0) target = $region53
    $region52: #{bert_forward.1} parent=1 // pred_region
      _
    $region53: #{bert_forward.1} parent=1 // pred_fallthru
      _
    // Predicated region
    $region54: #{bert_forward.1} parent=1 // pred_check
      _
    $region55: #{bert_forward.1} parent=1 // pred_check_branch
      %51 = sbr.rel (0) target = $region57
    $region56: #{bert_forward.1} parent=1 // pred_region
      _
    $region57: #{bert_forward.1} parent=1 // pred_fallthru
      _
    // Predicated region
    $region58: #{bert_forward.1} parent=1 // pred_check
      _
    $region59: #{bert_forward.1} parent=1 // pred_check_branch
      %53 = sbr.rel (0) target = $region61
    $region60: #{bert_forward.1} parent=1 // pred_region
      _
    $region61: #{bert_forward.1} parent=1 // pred_fallthru
      _
    // Predicated region
    $region62: #{bert_forward.1} parent=1 // pred_check
      _
    $region63: #{bert_forward.1} parent=1 // pred_check_branch
      %55 = sbr.rel (0) target = $region65
    $region64: #{bert_forward.1} parent=1 // pred_region
      _
    $region65: #{bert_forward.1} parent=1 // pred_fallthru
      _
    %v56 = vld [vmem:[%s0] sm:$0xff]
    %v57 = vld [vmem:[%s0 + $0x8] sm:$0xff]
    %v58 = vld [vmem:[%s1] sm:$0xff]
    %v59 = vld [vmem:[%s1 + $0x8] sm:$0xff]
    %v60 = vld [vmem:[%s2] sm:$0xff]
    %v61 = vld [vmem:[%s2 + $0x8] sm:$0xff]
    %v62 = vld [vmem:[%s2 + $0x10] sm:$0xff]
    %v63 = vld [vmem:[%s2 + $0x18] sm:$0xff]
    %v64 = vld [vmem:[%s3] sm:$0x1]
    %v65 = vld [vmem:[%s4] sm:$0xff]
    %v66 = vld [vmem:[%s4 + $0x8] sm:$0xff]
    %v67 = vld [vmem:[%s4 + $0x10] sm:$0xff]
    %v68 = vld [vmem:[%s4 + $0x18] sm:$0xff]
    %v69 = vld [vmem:[%s5] sm:$0x1]
    %v70 = vld [vmem:[%s6] sm:$0x1]
    %v71 = vld [vmem:[%s7] sm:$0x1]
    %v72 = vld [vmem:[%s8] sm:$0xff]
    %v73 = vld [vmem:[%s8 + $0x8] sm:$0xff]
    %v74 = vld [vmem:[%s8 + $0x10] sm:$0xff]
    %v75 = vld [vmem:[%s8 + $0x18] sm:$0xff]
    %v76 = vld [vmem:[%s9] sm:$0x1]
    %v77 = vld [vmem:[%s10] sm:$0xff]
    %v78 = vld [vmem:[%s10 + $0x8] sm:$0xff]
    %v79 = vld [vmem:[%s10 + $0x10] sm:$0xff]
    %v80 = vld [vmem:[%s10 + $0x18] sm:$0xff]
    %v81 = vld [vmem:[%s10 + $0x20] sm:$0xff]
    %v82 = vld [vmem:[%s10 + $0x28] sm:$0xff]
    %v83 = vld [vmem:[%s10 + $0x30] sm:$0xff]
    %v84 = vld [vmem:[%s10 + $0x38] sm:$0xff]
    %v85 = vld [vmem:[%s11] sm:$0x1]
    %v86 = vld [vmem:[%s12] sm:$0x1]
    %v87 = vld [vmem:[%s13] sm:$0x1]
    %v88 = vld [vmem:[%s14] sm:$0xff]
    %v89 = vld [vmem:[%s14 + $0x8] sm:$0xff]
    %v90 = vld [vmem:[%s14 + $0x10] sm:$0xff]
    %v91 = vld [vmem:[%s14 + $0x18] sm:$0xff]
    %v92 = vld [vmem:[%s15] sm:$0x1]
    %v94 = vlaneseq
    %v95 = vshrl.u32 %v94, 7
    %v96 = vsub.s32 0, %v95
    %v97 = vrot.slane %v64, %v96
    %vm99 = vcmask 261120
    %v101 = vsel %vm99, %v56, 0
    %v104 = vsel %vm99, %v57, 0
    %106 = vmatprep.subr.mxu0 0.0
    %107 = vmatpush1.msra.mxu0 %v60
    %108 = vmatprep.subr.mxu0 0.0
    %109 = vmatpush1.msra.mxu0 %v61
    %110 = vmatprep.subr.mxu0 0.0
    %111 = vmatpush1.msra.mxu0 %v62
    %112 = vmatprep.subr.mxu0 0.0
    %113 = vmatpush1.msra.mxu0 %v63
    %114 = vmatprep.subr.mxu0 0.0
    %115 = vmatpush1.msra.mxu0 0.0
    %116 = vmatprep.subr.mxu0 0.0
    %117 = vmatpush1.msra.mxu0 0.0
    %118 = vmatprep.subr.mxu0 0.0
    %119 = vmatpush1.msra.mxu0 0.0
    %120 = vmatprep.subr.mxu0 0.0
    %121 = vmatpush1.msra.mxu0 0.0
    %122 = vmatprep.subr.mxu0 0.0
    %123 = vmatpush1.msra.mxu0 0.0
    %124 = vmatprep.subr.mxu0 0.0
    %125 = vmatpush1.msra.mxu0 0.0
    %126 = vmatprep.subr.mxu0 0.0
    %127 = vmatpush1.msra.mxu0 0.0
    %128 = vmatprep.subr.mxu0 0.0
    %129 = vmatpush1.msra.mxu0 0.0
    %130 = vmatprep.subr.mxu0 0.0
    %131 = vmatpush1.msra.mxu0 0.0
    %132 = vmatprep.subr.mxu0 0.0
    %133 = vmatpush1.msra.mxu0 0.0
    %134 = vmatprep.subr.mxu0 0.0
    %135 = vmatpush1.msra.mxu0 0.0
    %136 = vmatprep.subr.mxu0 0.0
    %137 = vmatpush1.msra.mxu0 0.0
    %138 = vmatprep.subr.mxu0 0.0
    %139 = vmatpush1.msra.mxu0 0.0
    %140 = vmatprep.subr.mxu0 0.0
    %141 = vmatpush1.msra.mxu0 0.0
    %142 = vmatprep.subr.mxu0 0.0
    %143 = vmatpush1.msra.mxu0 0.0
    %144 = vmatprep.subr.mxu0 0.0
    %145 = vmatpush1.msra.mxu0 0.0
    %146 = vmatprep.subr.mxu0 0.0
    %147 = vmatpush1.msra.mxu0 0.0
    %148 = vmatprep.subr.mxu0 0.0
    %149 = vmatpush1.msra.mxu0 0.0
    %150 = vmatprep.subr.mxu0 0.0
    %151 = vmatpush1.msra.mxu0 0.0
    %152 = vmatprep.subr.mxu0 0.0
    %153 = vmatpush1.msra.mxu0 0.0
    %154 = vmatprep.subr.mxu0 0.0
    %155 = vmatpush1.msra.mxu0 0.0
    %156 = vmatprep.subr.mxu0 0.0
    %157 = vmatpush1.msra.mxu0 0.0
    %158 = vmatprep.subr.mxu0 0.0
    %159 = vmatpush1.msra.mxu0 0.0
    %160 = vmatprep.subr.mxu0 0.0
    %161 = vmatpush1.msra.mxu0 0.0
    %162 = vmatprep.subr.mxu0 0.0
    %163 = vmatpush1.msra.mxu0 0.0
    %164 = vmatprep.subr.mxu0 0.0
    %165 = vmatpush1.msra.mxu0 0.0
    %166 = vmatprep.subr.mxu0 0.0
    %167 = vmatpush1.msra.mxu0 0.0
    %168 = vmatprep.subr.mxu0 0.0
    %169 = vmatpush1.msra.mxu0 0.0
    %170 = vmatprep.mubr.f32.mxu0 0.0
    %171 = vmatmul.mubr.f32.gmra.mrb[0].mxu0 %v101
    %v172 = vpop.f32.mrb[0].mxu0
    %v173 = vadd.f32 %v97, %v172
    %v174 = vpop.f32.mrb[0].mxu0
    %175 = vmatprep.mubr.f32.mxu0 0.0
    %176 = vmatmul.mubr.f32.gmra.mrb[0].mxu0 %v104
    %v177 = vpop.f32.mrb[0].mxu0
    %v178 = vadd.f32 %v97, %v177
    %v179 = vpop.f32.mrb[0].mxu0
    %180 = vdwg.mxu0
    %183 = vrot.lane.b32.xlu0 %v173, 96
    %v184 = vpop.permute.xlu0 %183
    %185 = vrot.lane.b32.xlu0 %v178, 96
    %v186 = vpop.permute.xlu0 %185
    %vm187 = vcmask 130048
    %v188 = vsel %vm187, %v173, 0
    %v190 = vsel %vm187, %v178, 0
    %v192 = vsel %vm187, %v184, 0
    %v194 = vsel %vm187, %v186, 0
    %196 = vmatprep.subr.mxu0 0.0
    %197 = vmatpush1.xpose.msra.mxu0 %v192
    %198 = vmatprep.subr.mxu0 0.0
    %199 = vmatpush1.xpose.msra.mxu0 %v194
    %200 = vmatprep.subr.mxu0 0.0
    %201 = vmatpush1.xpose.msra.mxu0 0.0
    %202 = vmatprep.subr.mxu0 0.0
    %203 = vmatpush1.xpose.msra.mxu0 0.0
    %204 = vmatprep.subr.mxu0 0.0
    %205 = vmatpush1.xpose.msra.mxu0 0.0
    %206 = vmatprep.subr.mxu0 0.0
    %207 = vmatpush1.xpose.msra.mxu0 0.0
    %208 = vmatprep.subr.mxu0 0.0
    %209 = vmatpush1.xpose.msra.mxu0 0.0
    %210 = vmatprep.subr.mxu0 0.0
    %211 = vmatpush1.xpose.msra.mxu0 0.0
    %212 = vmatprep.subr.mxu0 0.0
    %213 = vmatpush1.xpose.msra.mxu0 0.0
    %214 = vmatprep.subr.mxu0 0.0
    %215 = vmatpush1.xpose.msra.mxu0 0.0
    %216 = vmatprep.subr.mxu0 0.0
    %217 = vmatpush1.xpose.msra.mxu0 0.0
    %218 = vmatprep.subr.mxu0 0.0
    %219 = vmatpush1.xpose.msra.mxu0 0.0
    %220 = vmatprep.subr.mxu0 0.0
    %221 = vmatpush1.xpose.msra.mxu0 0.0
    %222 = vmatprep.subr.mxu0 0.0
    %223 = vmatpush1.xpose.msra.mxu0 0.0
    %224 = vmatprep.subr.mxu0 0.0
    %225 = vmatpush1.xpose.msra.mxu0 0.0
    %226 = vmatprep.subr.mxu0 0.0
    %227 = vmatpush1.xpose.msra.mxu0 0.0
    %228 = vmatprep.subr.mxu0 0.0
    %229 = vmatpush1.xpose.msra.mxu0 0.0
    %230 = vmatprep.subr.mxu0 0.0
    %231 = vmatpush1.xpose.msra.mxu0 0.0
    %232 = vmatprep.subr.mxu0 0.0
    %233 = vmatpush1.xpose.msra.mxu0 0.0
    %234 = vmatprep.subr.mxu0 0.0
    %235 = vmatpush1.xpose.msra.mxu0 0.0
    %236 = vmatprep.subr.mxu0 0.0
    %237 = vmatpush1.xpose.msra.mxu0 0.0
    %238 = vmatprep.subr.mxu0 0.0
    %239 = vmatpush1.xpose.msra.mxu0 0.0
    %240 = vmatprep.subr.mxu0 0.0
    %241 = vmatpush1.xpose.msra.mxu0 0.0
    %242 = vmatprep.subr.mxu0 0.0
    %243 = vmatpush1.xpose.msra.mxu0 0.0
    %244 = vmatprep.subr.mxu0 0.0
    %245 = vmatpush1.xpose.msra.mxu0 0.0
    %246 = vmatprep.subr.mxu0 0.0
    %247 = vmatpush1.xpose.msra.mxu0 0.0
    %248 = vmatprep.subr.mxu0 0.0
    %249 = vmatpush1.xpose.msra.mxu0 0.0
    %250 = vmatprep.subr.mxu0 0.0
    %251 = vmatpush1.xpose.msra.mxu0 0.0
    %252 = vmatprep.subr.mxu0 0.0
    %253 = vmatpush1.xpose.msra.mxu0 0.0
    %254 = vmatprep.subr.mxu0 0.0
    %255 = vmatpush1.xpose.msra.mxu0 0.0
    %256 = vmatprep.subr.mxu0 0.0
    %257 = vmatpush1.xpose.msra.mxu0 0.0
    %258 = vmatprep.subr.mxu0 0.0
    %259 = vmatpush1.xpose.msra.mxu0 0.0
    %260 = vmatprep.mubr.f32.mxu0 0.0
    %261 = vmatmul.mubr.f32.gmra.mrb[0].mxu0 %v188
    %v262 = vpop.f32.mrb[0].mxu0
    %v263 = vadd.f32 %v58, %v262
    %v264 = vpop.f32.mrb[0].mxu0
    %265 = vmatprep.mubr.f32.mxu0 0.0
    %266 = vmatmul.mubr.f32.gmra.mrb[0].mxu0 %v190
    %v267 = vpop.f32.mrb[0].mxu0
    %v268 = vadd.f32 %v59, %v267
    %v269 = vpop.f32.mrb[0].mxu0
    %270 = vdwg.mxu0
    %v271 = vsel %vm187, %v263, -inf
    %272 = vmax.xlane.f32.xlu0 %v271
    %v273 = vpop.xlane.xlu0 %272
    %v274 = vsel %vm187, %v268, -inf
    %275 = vmax.xlane.f32.xlu0 %v274
    %v276 = vpop.xlane.xlu0 %275
    %v277 = vsub.f32 %v263, %v273
    %v278 = vsub.f32 %v268, %v276
    %v279 = vmul.f32 %v277, 1.442695
    %v280 = vpow.pop %v279
    %v281 = vmul.f32 %v278, 1.442695
    %v282 = vpow.pop %v281
    %v283 = vsel %vm187, %v280, 0.0
    %284 = vadd.xlane.f32.xlu0 %v283
    %v285 = vpop.xlane.xlu0 %284
    %v286 = vsel %vm187, %v282, 0.0
    %287 = vadd.xlane.f32.xlu0 %v286
    %v288 = vpop.xlane.xlu0 %287
    %289 = vrot.lane.b32.xlu0 %v173, 64
    %v290 = vpop.permute.xlu0 %289
    %291 = vrot.lane.b32.xlu0 %v178, 64
    %v292 = vpop.permute.xlu0 %291
    %v296 = vsel %vm187, %v280, 0
    %v299 = vsel %vm187, %v282, 0
    %301 = vmatprep.subr.mxu0 0.0
    %302 = vmatpush1.msra.mxu0 %v290
    %303 = vmatprep.subr.mxu0 0.0
    %304 = vmatpush1.msra.mxu0 %v292
    %305 = vmatprep.subr.mxu0 0.0
    %306 = vmatpush1.msra.mxu0 0.0
    %307 = vmatprep.subr.mxu0 0.0
    %308 = vmatpush1.msra.mxu0 0.0
    %309 = vmatprep.subr.mxu0 0.0
    %310 = vmatpush1.msra.mxu0 0.0
    %311 = vmatprep.subr.mxu0 0.0
    %312 = vmatpush1.msra.mxu0 0.0
    %313 = vmatprep.subr.mxu0 0.0
    %314 = vmatpush1.msra.mxu0 0.0
    %315 = vmatprep.subr.mxu0 0.0
    %316 = vmatpush1.msra.mxu0 0.0
    %317 = vmatprep.subr.mxu0 0.0
    %318 = vmatpush1.msra.mxu0 0.0
    %319 = vmatprep.subr.mxu0 0.0
    %320 = vmatpush1.msra.mxu0 0.0
    %321 = vmatprep.subr.mxu0 0.0
    %322 = vmatpush1.msra.mxu0 0.0
    %323 = vmatprep.subr.mxu0 0.0
    %324 = vmatpush1.msra.mxu0 0.0
    %325 = vmatprep.subr.mxu0 0.0
    %326 = vmatpush1.msra.mxu0 0.0
    %327 = vmatprep.subr.mxu0 0.0
    %328 = vmatpush1.msra.mxu0 0.0
    %329 = vmatprep.subr.mxu0 0.0
    %330 = vmatpush1.msra.mxu0 0.0
    %331 = vmatprep.subr.mxu0 0.0
    %332 = vmatpush1.msra.mxu0 0.0
    %333 = vmatprep.subr.mxu0 0.0
    %334 = vmatpush1.msra.mxu0 0.0
    %335 = vmatprep.subr.mxu0 0.0
    %336 = vmatpush1.msra.mxu0 0.0
    %337 = vmatprep.subr.mxu0 0.0
    %338 = vmatpush1.msra.mxu0 0.0
    %339 = vmatprep.subr.mxu0 0.0
    %340 = vmatpush1.msra.mxu0 0.0
    %341 = vmatprep.subr.mxu0 0.0
    %342 = vmatpush1.msra.mxu0 0.0
    %343 = vmatprep.subr.mxu0 0.0
    %344 = vmatpush1.msra.mxu0 0.0
    %345 = vmatprep.subr.mxu0 0.0
    %346 = vmatpush1.msra.mxu0 0.0
    %347 = vmatprep.subr.mxu0 0.0
    %348 = vmatpush1.msra.mxu0 0.0
    %349 = vmatprep.subr.mxu0 0.0
    %350 = vmatpush1.msra.mxu0 0.0
    %351 = vmatprep.subr.mxu0 0.0
    %352 = vmatpush1.msra.mxu0 0.0
    %353 = vmatprep.subr.mxu0 0.0
    %354 = vmatpush1.msra.mxu0 0.0
    %355 = vmatprep.subr.mxu0 0.0
    %356 = vmatpush1.msra.mxu0 0.0
    %357 = vmatprep.subr.mxu0 0.0
    %358 = vmatpush1.msra.mxu0 0.0
    %359 = vmatprep.subr.mxu0 0.0
    %360 = vmatpush1.msra.mxu0 0.0
    %361 = vmatprep.subr.mxu0 0.0
    %362 = vmatpush1.msra.mxu0 0.0
    %363 = vmatprep.subr.mxu0 0.0
    %364 = vmatpush1.msra.mxu0 0.0
    %365 = vmatprep.mubr.f32.mxu0 0.0
    %366 = vmatmul.mubr.f32.gmra.mrb[0].mxu0 %v296
    %v367 = vpop.f32.mrb[0].mxu0
    %v368 = vadd.f32 0.0, %v367
    %v369 = vpop.f32.mrb[0].mxu0
    %370 = vmatprep.mubr.f32.mxu0 0.0
    %371 = vmatmul.mubr.f32.gmra.mrb[0].mxu0 %v299
    %v372 = vpop.f32.mrb[0].mxu0
    %v373 = vadd.f32 0.0, %v372
    %v374 = vpop.f32.mrb[0].mxu0
    %375 = vdwg.mxu0
    %v376 = vrcp.pop %v285
    %v377 = vrcp.pop %v288
    %v378 = vmul.f32 %v368, %v376
    %v379 = vmul.f32 %v373, %v377
    %380 = vrot.lane.b32.xlu0 %v173, 112
    %v381 = vpop.permute.xlu0 %380
    %382 = vrot.lane.b32.xlu0 %v178, 112
    %v383 = vpop.permute.xlu0 %382
    %384 = vrot.lane.b32.xlu0 %v173, 80
    %v385 = vpop.permute.xlu0 %384
    %386 = vrot.lane.b32.xlu0 %v178, 80
    %v387 = vpop.permute.xlu0 %386
    %v388 = vsel %vm187, %v381, 0
    %v390 = vsel %vm187, %v383, 0
    %v392 = vsel %vm187, %v385, 0
    %v394 = vsel %vm187, %v387, 0
    %396 = vmatprep.subr.mxu0 0.0
    %397 = vmatpush1.xpose.msra.mxu0 %v392
    %398 = vmatprep.subr.mxu0 0.0
    %399 = vmatpush1.xpose.msra.mxu0 %v394
    %400 = vmatprep.subr.mxu0 0.0
    %401 = vmatpush1.xpose.msra.mxu0 0.0
    %402 = vmatprep.subr.mxu0 0.0
    %403 = vmatpush1.xpose.msra.mxu0 0.0
    %404 = vmatprep.subr.mxu0 0.0
    %405 = vmatpush1.xpose.msra.mxu0 0.0
    %406 = vmatprep.subr.mxu0 0.0
    %407 = vmatpush1.xpose.msra.mxu0 0.0
    %408 = vmatprep.subr.mxu0 0.0
    %409 = vmatpush1.xpose.msra.mxu0 0.0
    %410 = vmatprep.subr.mxu0 0.0
    %411 = vmatpush1.xpose.msra.mxu0 0.0
    %412 = vmatprep.subr.mxu0 0.0
    %413 = vmatpush1.xpose.msra.mxu0 0.0
    %414 = vmatprep.subr.mxu0 0.0
    %415 = vmatpush1.xpose.msra.mxu0 0.0
    %416 = vmatprep.subr.mxu0 0.0
    %417 = vmatpush1.xpose.msra.mxu0 0.0
    %418 = vmatprep.subr.mxu0 0.0
    %419 = vmatpush1.xpose.msra.mxu0 0.0
    %420 = vmatprep.subr.mxu0 0.0
    %421 = vmatpush1.xpose.msra.mxu0 0.0
    %422 = vmatprep.subr.mxu0 0.0
    %423 = vmatpush1.xpose.msra.mxu0 0.0
    %424 = vmatprep.subr.mxu0 0.0
    %425 = vmatpush1.xpose.msra.mxu0 0.0
    %426 = vmatprep.subr.mxu0 0.0
    %427 = vmatpush1.xpose.msra.mxu0 0.0
    %428 = vmatprep.subr.mxu0 0.0
    %429 = vmatpush1.xpose.msra.mxu0 0.0
    %430 = vmatprep.subr.mxu0 0.0
    %431 = vmatpush1.xpose.msra.mxu0 0.0
    %432 = vmatprep.subr.mxu0 0.0
    %433 = vmatpush1.xpose.msra.mxu0 0.0
    %434 = vmatprep.subr.mxu0 0.0
    %435 = vmatpush1.xpose.msra.mxu0 0.0
    %436 = vmatprep.subr.mxu0 0.0
    %437 = vmatpush1.xpose.msra.mxu0 0.0
    %438 = vmatprep.subr.mxu0 0.0
    %439 = vmatpush1.xpose.msra.mxu0 0.0
    %440 = vmatprep.subr.mxu0 0.0
    %441 = vmatpush1.xpose.msra.mxu0 0.0
    %442 = vmatprep.subr.mxu0 0.0
    %443 = vmatpush1.xpose.msra.mxu0 0.0
    %444 = vmatprep.subr.mxu0 0.0
    %445 = vmatpush1.xpose.msra.mxu0 0.0
    %446 = vmatprep.subr.mxu0 0.0
    %447 = vmatpush1.xpose.msra.mxu0 0.0
    %448 = vmatprep.subr.mxu0 0.0
    %449 = vmatpush1.xpose.msra.mxu0 0.0
    %450 = vmatprep.subr.mxu0 0.0
    %451 = vmatpush1.xpose.msra.mxu0 0.0
    %452 = vmatprep.subr.mxu0 0.0
    %453 = vmatpush1.xpose.msra.mxu0 0.0
    %454 = vmatprep.subr.mxu0 0.0
    %455 = vmatpush1.xpose.msra.mxu0 0.0
    %456 = vmatprep.subr.mxu0 0.0
    %457 = vmatpush1.xpose.msra.mxu0 0.0
    %458 = vmatprep.subr.mxu0 0.0
    %459 = vmatpush1.xpose.msra.mxu0 0.0
    %460 = vmatprep.mubr.f32.mxu0 0.0
    %461 = vmatmul.mubr.f32.gmra.mrb[0].mxu0 %v388
    %v462 = vpop.f32.mrb[0].mxu0
    %v463 = vadd.f32 %v58, %v462
    %v464 = vpop.f32.mrb[0].mxu0
    %465 = vmatprep.mubr.f32.mxu0 0.0
    %466 = vmatmul.mubr.f32.gmra.mrb[0].mxu0 %v390
    %v467 = vpop.f32.mrb[0].mxu0
    %v468 = vadd.f32 %v59, %v467
    %v469 = vpop.f32.mrb[0].mxu0
    %470 = vdwg.mxu0
    %v471 = vsel %vm187, %v463, -inf
    %472 = vmax.xlane.f32.xlu0 %v471
    %v473 = vpop.xlane.xlu0 %472
    %v474 = vsel %vm187, %v468, -inf
    %475 = vmax.xlane.f32.xlu0 %v474
    %v476 = vpop.xlane.xlu0 %475
    %v477 = vsub.f32 %v463, %v473
    %v478 = vsub.f32 %v468, %v476
    %v479 = vmul.f32 %v477, 1.442695
    %v480 = vpow.pop %v479
    %v481 = vmul.f32 %v478, 1.442695
    %v482 = vpow.pop %v481
    %v483 = vsel %vm187, %v480, 0.0
    %484 = vadd.xlane.f32.xlu0 %v483
    %v485 = vpop.xlane.xlu0 %484
    %v486 = vsel %vm187, %v482, 0.0
    %487 = vadd.xlane.f32.xlu0 %v486
    %v488 = vpop.xlane.xlu0 %487
    %489 = vrot.lane.b32.xlu0 %v173, 48
    %v490 = vpop.permute.xlu0 %489
    %491 = vrot.lane.b32.xlu0 %v178, 48
    %v492 = vpop.permute.xlu0 %491
    %v496 = vsel %vm187, %v480, 0
    %v499 = vsel %vm187, %v482, 0
    %501 = vmatprep.subr.mxu0 0.0
    %502 = vmatpush1.msra.mxu0 %v490
    %503 = vmatprep.subr.mxu0 0.0
    %504 = vmatpush1.msra.mxu0 %v492
    %505 = vmatprep.subr.mxu0 0.0
    %506 = vmatpush1.msra.mxu0 0.0
    %507 = vmatprep.subr.mxu0 0.0
    %508 = vmatpush1.msra.mxu0 0.0
    %509 = vmatprep.subr.mxu0 0.0
    %510 = vmatpush1.msra.mxu0 0.0
    %511 = vmatprep.subr.mxu0 0.0
    %512 = vmatpush1.msra.mxu0 0.0
    %513 = vmatprep.subr.mxu0 0.0
    %514 = vmatpush1.msra.mxu0 0.0
    %515 = vmatprep.subr.mxu0 0.0
    %516 = vmatpush1.msra.mxu0 0.0
    %517 = vmatprep.subr.mxu0 0.0
    %518 = vmatpush1.msra.mxu0 0.0
    %519 = vmatprep.subr.mxu0 0.0
    %520 = vmatpush1.msra.mxu0 0.0
    %521 = vmatprep.subr.mxu0 0.0
    %522 = vmatpush1.msra.mxu0 0.0
    %523 = vmatprep.subr.mxu0 0.0
    %524 = vmatpush1.msra.mxu0 0.0
    %525 = vmatprep.subr.mxu0 0.0
    %526 = vmatpush1.msra.mxu0 0.0
    %527 = vmatprep.subr.mxu0 0.0
    %528 = vmatpush1.msra.mxu0 0.0
    %529 = vmatprep.subr.mxu0 0.0
    %530 = vmatpush1.msra.mxu0 0.0
    %531 = vmatprep.subr.mxu0 0.0
    %532 = vmatpush1.msra.mxu0 0.0
    %533 = vmatprep.subr.mxu0 0.0
    %534 = vmatpush1.msra.mxu0 0.0
    %535 = vmatprep.subr.mxu0 0.0
    %536 = vmatpush1.msra.mxu0 0.0
    %537 = vmatprep.subr.mxu0 0.0
    %538 = vmatpush1.msra.mxu0 0.0
    %539 = vmatprep.subr.mxu0 0.0
    %540 = vmatpush1.msra.mxu0 0.0
    %541 = vmatprep.subr.mxu0 0.0
    %542 = vmatpush1.msra.mxu0 0.0
    %543 = vmatprep.subr.mxu0 0.0
    %544 = vmatpush1.msra.mxu0 0.0
    %545 = vmatprep.subr.mxu0 0.0
    %546 = vmatpush1.msra.mxu0 0.0
    %547 = vmatprep.subr.mxu0 0.0
    %548 = vmatpush1.msra.mxu0 0.0
    %549 = vmatprep.subr.mxu0 0.0
    %550 = vmatpush1.msra.mxu0 0.0
    %551 = vmatprep.subr.mxu0 0.0
    %552 = vmatpush1.msra.mxu0 0.0
    %553 = vmatprep.subr.mxu0 0.0
    %554 = vmatpush1.msra.mxu0 0.0
    %555 = vmatprep.subr.mxu0 0.0
    %556 = vmatpush1.msra.mxu0 0.0
    %557 = vmatprep.subr.mxu0 0.0
    %558 = vmatpush1.msra.mxu0 0.0
    %559 = vmatprep.subr.mxu0 0.0
    %560 = vmatpush1.msra.mxu0 0.0
    %561 = vmatprep.subr.mxu0 0.0
    %562 = vmatpush1.msra.mxu0 0.0
    %563 = vmatprep.subr.mxu0 0.0
    %564 = vmatpush1.msra.mxu0 0.0
    %565 = vmatprep.mubr.f32.mxu0 0.0
    %566 = vmatmul.mubr.f32.gmra.mrb[0].mxu0 %v496
    %v567 = vpop.f32.mrb[0].mxu0
    %v568 = vadd.f32 0.0, %v567
    %v569 = vpop.f32.mrb[0].mxu0
    %570 = vmatprep.mubr.f32.mxu0 0.0
    %571 = vmatmul.mubr.f32.gmra.mrb[0].mxu0 %v499
    %v572 = vpop.f32.mrb[0].mxu0
    %v573 = vadd.f32 0.0, %v572
    %v574 = vpop.f32.mrb[0].mxu0
    %575 = vdwg.mxu0
    %v576 = vrcp.pop %v485
    %v577 = vrcp.pop %v488
    %v578 = vmul.f32 %v568, %v576
    %v579 = vmul.f32 %v573, %v577
    %v581 = vsel %vm187, %v578, 0
    %v584 = vsel %vm187, %v579, 0
    %586 = vmatprep.subr.mxu0 0.0
    %587 = vmatpush1.msra.mxu0 %v67
    %588 = vmatprep.subr.mxu0 0.0
    %589 = vmatpush1.msra.mxu0 %v68
    %590 = vmatprep.subr.mxu0 0.0
    %591 = vmatpush1.msra.mxu0 0.0
    %592 = vmatprep.subr.mxu0 0.0
    %593 = vmatpush1.msra.mxu0 0.0
    %594 = vmatprep.subr.mxu0 0.0
    %595 = vmatpush1.msra.mxu0 0.0
    %596 = vmatprep.subr.mxu0 0.0
    %597 = vmatpush1.msra.mxu0 0.0
    %598 = vmatprep.subr.mxu0 0.0
    %599 = vmatpush1.msra.mxu0 0.0
    %600 = vmatprep.subr.mxu0 0.0
    %601 = vmatpush1.msra.mxu0 0.0
    %602 = vmatprep.subr.mxu0 0.0
    %603 = vmatpush1.msra.mxu0 0.0
    %604 = vmatprep.subr.mxu0 0.0
    %605 = vmatpush1.msra.mxu0 0.0
    %606 = vmatprep.subr.mxu0 0.0
    %607 = vmatpush1.msra.mxu0 0.0
    %608 = vmatprep.subr.mxu0 0.0
    %609 = vmatpush1.msra.mxu0 0.0
    %610 = vmatprep.subr.mxu0 0.0
    %611 = vmatpush1.msra.mxu0 0.0
    %612 = vmatprep.subr.mxu0 0.0
    %613 = vmatpush1.msra.mxu0 0.0
    %614 = vmatprep.subr.mxu0 0.0
    %615 = vmatpush1.msra.mxu0 0.0
    %616 = vmatprep.subr.mxu0 0.0
    %617 = vmatpush1.msra.mxu0 0.0
    %618 = vmatprep.subr.mxu0 0.0
    %619 = vmatpush1.msra.mxu0 0.0
    %620 = vmatprep.subr.mxu0 0.0
    %621 = vmatpush1.msra.mxu0 0.0
    %622 = vmatprep.subr.mxu0 0.0
    %623 = vmatpush1.msra.mxu0 0.0
    %624 = vmatprep.subr.mxu0 0.0
    %625 = vmatpush1.msra.mxu0 0.0
    %626 = vmatprep.subr.mxu0 0.0
    %627 = vmatpush1.msra.mxu0 0.0
    %628 = vmatprep.subr.mxu0 0.0
    %629 = vmatpush1.msra.mxu0 0.0
    %630 = vmatprep.subr.mxu0 0.0
    %631 = vmatpush1.msra.mxu0 0.0
    %632 = vmatprep.subr.mxu0 0.0
    %633 = vmatpush1.msra.mxu0 0.0
    %634 = vmatprep.subr.mxu0 0.0
    %635 = vmatpush1.msra.mxu0 0.0
    %636 = vmatprep.subr.mxu0 0.0
    %637 = vmatpush1.msra.mxu0 0.0
    %638 = vmatprep.subr.mxu0 0.0
    %639 = vmatpush1.msra.mxu0 0.0
    %640 = vmatprep.subr.mxu0 0.0
    %641 = vmatpush1.msra.mxu0 0.0
    %642 = vmatprep.subr.mxu0 0.0
    %643 = vmatpush1.msra.mxu0 0.0
    %644 = vmatprep.subr.mxu0 0.0
    %645 = vmatpush1.msra.mxu0 0.0
    %646 = vmatprep.subr.mxu0 0.0
    %647 = vmatpush1.msra.mxu0 0.0
    %648 = vmatprep.subr.mxu0 0.0
    %649 = vmatpush1.msra.mxu0 0.0
    %650 = vmatprep.mubr.f32.mxu0 0.0
    %651 = vmatmul.mubr.f32.gmra.mrb[0].mxu0 %v581
    %v652 = vpop.f32.mrb[0].mxu0
    %v653 = vadd.f32 0.0, %v652
    %v654 = vpop.f32.mrb[0].mxu0
    %655 = vmatprep.mubr.f32.mxu0 0.0
    %656 = vmatmul.mubr.f32.gmra.mrb[0].mxu0 %v584
    %v657 = vpop.f32.mrb[0].mxu0
    %v658 = vadd.f32 0.0, %v657
    %v659 = vpop.f32.mrb[0].mxu0
    %660 = vdwg.mxu0
    %v662 = vsel %vm187, %v378, 0
    %v665 = vsel %vm187, %v379, 0
    %667 = vmatprep.subr.mxu0 0.0
    %668 = vmatpush1.msra.mxu0 %v65
    %669 = vmatprep.subr.mxu0 0.0
    %670 = vmatpush1.msra.mxu0 %v66
    %671 = vmatprep.subr.mxu0 0.0
    %672 = vmatpush1.msra.mxu0 0.0
    %673 = vmatprep.subr.mxu0 0.0
    %674 = vmatpush1.msra.mxu0 0.0
    %675 = vmatprep.subr.mxu0 0.0
    %676 = vmatpush1.msra.mxu0 0.0
    %677 = vmatprep.subr.mxu0 0.0
    %678 = vmatpush1.msra.mxu0 0.0
    %679 = vmatprep.subr.mxu0 0.0
    %680 = vmatpush1.msra.mxu0 0.0
    %681 = vmatprep.subr.mxu0 0.0
    %682 = vmatpush1.msra.mxu0 0.0
    %683 = vmatprep.subr.mxu0 0.0
    %684 = vmatpush1.msra.mxu0 0.0
    %685 = vmatprep.subr.mxu0 0.0
    %686 = vmatpush1.msra.mxu0 0.0
    %687 = vmatprep.subr.mxu0 0.0
    %688 = vmatpush1.msra.mxu0 0.0
    %689 = vmatprep.subr.mxu0 0.0
    %690 = vmatpush1.msra.mxu0 0.0
    %691 = vmatprep.subr.mxu0 0.0
    %692 = vmatpush1.msra.mxu0 0.0
    %693 = vmatprep.subr.mxu0 0.0
    %694 = vmatpush1.msra.mxu0 0.0
    %695 = vmatprep.subr.mxu0 0.0
    %696 = vmatpush1.msra.mxu0 0.0
    %697 = vmatprep.subr.mxu0 0.0
    %698 = vmatpush1.msra.mxu0 0.0
    %699 = vmatprep.subr.mxu0 0.0
    %700 = vmatpush1.msra.mxu0 0.0
    %701 = vmatprep.subr.mxu0 0.0
    %702 = vmatpush1.msra.mxu0 0.0
    %703 = vmatprep.subr.mxu0 0.0
    %704 = vmatpush1.msra.mxu0 0.0
    %705 = vmatprep.subr.mxu0 0.0
    %706 = vmatpush1.msra.mxu0 0.0
    %707 = vmatprep.subr.mxu0 0.0
    %708 = vmatpush1.msra.mxu0 0.0
    %709 = vmatprep.subr.mxu0 0.0
    %710 = vmatpush1.msra.mxu0 0.0
    %711 = vmatprep.subr.mxu0 0.0
    %712 = vmatpush1.msra.mxu0 0.0
    %713 = vmatprep.subr.mxu0 0.0
    %714 = vmatpush1.msra.mxu0 0.0
    %715 = vmatprep.subr.mxu0 0.0
    %716 = vmatpush1.msra.mxu0 0.0
    %717 = vmatprep.subr.mxu0 0.0
    %718 = vmatpush1.msra.mxu0 0.0
    %719 = vmatprep.subr.mxu0 0.0
    %720 = vmatpush1.msra.mxu0 0.0
    %721 = vmatprep.subr.mxu0 0.0
    %722 = vmatpush1.msra.mxu0 0.0
    %723 = vmatprep.subr.mxu0 0.0
    %724 = vmatpush1.msra.mxu0 0.0
    %725 = vmatprep.subr.mxu0 0.0
    %726 = vmatpush1.msra.mxu0 0.0
    %727 = vmatprep.subr.mxu0 0.0
    %728 = vmatpush1.msra.mxu0 0.0
    %729 = vmatprep.subr.mxu0 0.0
    %730 = vmatpush1.msra.mxu0 0.0
    %731 = vmatprep.mubr.f32.mxu0 0.0
    %732 = vmatmul.mubr.f32.gmra.mrb[0].mxu0 %v662
    %v733 = vpop.f32.mrb[0].mxu0
    %v734 = vadd.f32 %v653, %v733
    %v735 = vpop.f32.mrb[0].mxu0
    %736 = vmatprep.mubr.f32.mxu0 0.0
    %737 = vmatmul.mubr.f32.gmra.mrb[0].mxu0 %v665
    %v738 = vpop.f32.mrb[0].mxu0
    %v739 = vadd.f32 %v658, %v738
    %v740 = vpop.f32.mrb[0].mxu0
    %741 = vdwg.mxu0
    %v743 = vlaneseq
    %v744 = vshrl.u32 %v743, 7
    %v745 = vsub.s32 0, %v744
    %v746 = vrot.slane %v69, %v745
    %v748 = vadd.f32 %v734, %v746
    %v749 = vadd.f32 %v739, %v746
    %v750 = vadd.f32 %v56, %v748
    %v751 = vadd.f32 %v57, %v749
    %v752 = vsel %vm99, %v750, 0.0
    %753 = vadd.xlane.f32.xlu0 %v752
    %v754 = vpop.xlane.xlu0 %753
    %v755 = vsel %vm99, %v751, 0.0
    %756 = vadd.xlane.f32.xlu0 %v755
    %v757 = vpop.xlane.xlu0 %756
    %v758 = vrcp.pop 32.0
    %v759 = vmul.f32 %v754, %v758
    %v760 = vmul.f32 %v757, %v758
    %v761 = vsub.f32 %v750, %v759
    %v762 = vsub.f32 %v751, %v760
    %v763 = vmul.f32 %v761, %v761
    %v764 = vmul.f32 %v762, %v762
    %v765 = vsel %vm99, %v763, 0.0
    %766 = vadd.xlane.f32.xlu0 %v765
    %v767 = vpop.xlane.xlu0 %766
    %v768 = vsel %vm99, %v764, 0.0
    %769 = vadd.xlane.f32.xlu0 %v768
    %v770 = vpop.xlane.xlu0 %769
    %v771 = vmul.f32 %v767, 0.032258064
    %v772 = vmul.f32 %v770, 0.032258064
    %v773 = vrsqrt.pop %v771
    %v774 = vmul.f32 %v771, %v773
    %vm775 = vcmp.eq.f32.partialorder %v771, inf
    %v776 = vsel %vm775, %v771, %v774
    %vm777 = vcmp.eq.f32.partialorder %v771, 0.0
    %v778 = vand.u32 %v771, 2147483648
    %v779 = vsel %vm777, %v778, %v776
    %v780 = vrsqrt.pop %v772
    %v781 = vmul.f32 %v772, %v780
    %vm782 = vcmp.eq.f32.partialorder %v772, inf
    %v783 = vsel %vm782, %v772, %v781
    %vm784 = vcmp.eq.f32.partialorder %v772, 0.0
    %v785 = vand.u32 %v772, 2147483648
    %v786 = vsel %vm784, %v785, %v783
    %v788 = vlaneseq
    %v789 = vshrl.u32 %v788, 7
    %v790 = vsub.s32 0, %v789
    %v791 = vrot.slane %v70, %v790
    %v793 = vmul.f32 %v791, %v761
    %v794 = vmul.f32 %v791, %v762
    %v795 = vadd.f32 %v779, 1e-06
    %v796 = vadd.f32 %v786, 1e-06
    %v797 = vrcp.pop %v795
    %v798 = vmul.f32 %v793, %v797
    %v799 = vrcp.pop %v796
    %v800 = vmul.f32 %v794, %v799
    %v802 = vlaneseq
    %v803 = vshrl.u32 %v802, 7
    %v804 = vsub.s32 0, %v803
    %v805 = vrot.slane %v71, %v804
    %v807 = vadd.f32 %v798, %v805
    %v808 = vadd.f32 %v800, %v805
    %v810 = vlaneseq
    %v811 = vshrl.u32 %v810, 7
    %v812 = vsub.s32 0, %v811
    %v813 = vrot.slane %v76, %v812
    %v816 = vsel %vm99, %v807, 0
    %v819 = vsel %vm99, %v808, 0
    %821 = vmatprep.subr.mxu0 0.0
    %822 = vmatpush1.msra.mxu0 %v72
    %823 = vmatprep.subr.mxu0 0.0
    %824 = vmatpush1.msra.mxu0 %v73
    %825 = vmatprep.subr.mxu0 0.0
    %826 = vmatpush1.msra.mxu0 %v74
    %827 = vmatprep.subr.mxu0 0.0
    %828 = vmatpush1.msra.mxu0 %v75
    %829 = vmatprep.subr.mxu0 0.0
    %830 = vmatpush1.msra.mxu0 0.0
    %831 = vmatprep.subr.mxu0 0.0
    %832 = vmatpush1.msra.mxu0 0.0
    %833 = vmatprep.subr.mxu0 0.0
    %834 = vmatpush1.msra.mxu0 0.0
    %835 = vmatprep.subr.mxu0 0.0
    %836 = vmatpush1.msra.mxu0 0.0
    %837 = vmatprep.subr.mxu0 0.0
    %838 = vmatpush1.msra.mxu0 0.0
    %839 = vmatprep.subr.mxu0 0.0
    %840 = vmatpush1.msra.mxu0 0.0
    %841 = vmatprep.subr.mxu0 0.0
    %842 = vmatpush1.msra.mxu0 0.0
    %843 = vmatprep.subr.mxu0 0.0
    %844 = vmatpush1.msra.mxu0 0.0
    %845 = vmatprep.subr.mxu0 0.0
    %846 = vmatpush1.msra.mxu0 0.0
    %847 = vmatprep.subr.mxu0 0.0
    %848 = vmatpush1.msra.mxu0 0.0
    %849 = vmatprep.subr.mxu0 0.0
    %850 = vmatpush1.msra.mxu0 0.0
    %851 = vmatprep.subr.mxu0 0.0
    %852 = vmatpush1.msra.mxu0 0.0
    %853 = vmatprep.subr.mxu0 0.0
    %854 = vmatpush1.msra.mxu0 0.0
    %855 = vmatprep.subr.mxu0 0.0
    %856 = vmatpush1.msra.mxu0 0.0
    %857 = vmatprep.subr.mxu0 0.0
    %858 = vmatpush1.msra.mxu0 0.0
    %859 = vmatprep.subr.mxu0 0.0
    %860 = vmatpush1.msra.mxu0 0.0
    %861 = vmatprep.subr.mxu0 0.0
    %862 = vmatpush1.msra.mxu0 0.0
    %863 = vmatprep.subr.mxu0 0.0
    %864 = vmatpush1.msra.mxu0 0.0
    %865 = vmatprep.subr.mxu0 0.0
    %866 = vmatpush1.msra.mxu0 0.0
    %867 = vmatprep.subr.mxu0 0.0
    %868 = vmatpush1.msra.mxu0 0.0
    %869 = vmatprep.subr.mxu0 0.0
    %870 = vmatpush1.msra.mxu0 0.0
    %871 = vmatprep.subr.mxu0 0.0
    %872 = vmatpush1.msra.mxu0 0.0
    %873 = vmatprep.subr.mxu0 0.0
    %874 = vmatpush1.msra.mxu0 0.0
    %875 = vmatprep.subr.mxu0 0.0
    %876 = vmatpush1.msra.mxu0 0.0
    %877 = vmatprep.subr.mxu0 0.0
    %878 = vmatpush1.msra.mxu0 0.0
    %879 = vmatprep.subr.mxu0 0.0
    %880 = vmatpush1.msra.mxu0 0.0
    %881 = vmatprep.subr.mxu0 0.0
    %882 = vmatpush1.msra.mxu0 0.0
    %883 = vmatprep.subr.mxu0 0.0
    %884 = vmatpush1.msra.mxu0 0.0
    %885 = vmatprep.mubr.f32.mxu0 0.0
    %886 = vmatmul.mubr.f32.gmra.mrb[0].mxu0 %v816
    %v887 = vpop.f32.mrb[0].mxu0
    %v888 = vadd.f32 %v813, %v887
    %v889 = vpop.f32.mrb[0].mxu0
    %890 = vmatprep.mubr.f32.mxu0 0.0
    %891 = vmatmul.mubr.f32.gmra.mrb[0].mxu0 %v819
    %v892 = vpop.f32.mrb[0].mxu0
    %v893 = vadd.f32 %v813, %v892
    %v894 = vpop.f32.mrb[0].mxu0
    %895 = vdwg.mxu0
    %v896 = vmax.f32 %v888, 0.0
    %v897 = vmax.f32 %v893, 0.0
    %v899 = vlaneseq
    %v900 = vshrl.u32 %v899, 7
    %v901 = vsub.s32 0, %v900
    %v902 = vrot.slane %v85, %v901
    %vm904 = vcmask 523264
    %v906 = vsel %vm904, %v896, 0
    %v909 = vsel %vm904, %v897, 0
    %911 = vmatprep.subr.mxu0 0.0
    %912 = vmatpush1.msra.mxu0 %v77
    %913 = vmatprep.subr.mxu0 0.0
    %914 = vmatpush1.msra.mxu0 %v78
    %915 = vmatprep.subr.mxu0 0.0
    %916 = vmatpush1.msra.mxu0 %v79
    %917 = vmatprep.subr.mxu0 0.0
    %918 = vmatpush1.msra.mxu0 %v80
    %919 = vmatprep.subr.mxu0 0.0
    %920 = vmatpush1.msra.mxu0 %v81
    %921 = vmatprep.subr.mxu0 0.0
    %922 = vmatpush1.msra.mxu0 %v82
    %923 = vmatprep.subr.mxu0 0.0
    %924 = vmatpush1.msra.mxu0 %v83
    %925 = vmatprep.subr.mxu0 0.0
    %926 = vmatpush1.msra.mxu0 %v84
    %927 = vmatprep.subr.mxu0 0.0
    %928 = vmatpush1.msra.mxu0 0.0
    %929 = vmatprep.subr.mxu0 0.0
    %930 = vmatpush1.msra.mxu0 0.0
    %931 = vmatprep.subr.mxu0 0.0
    %932 = vmatpush1.msra.mxu0 0.0
    %933 = vmatprep.subr.mxu0 0.0
    %934 = vmatpush1.msra.mxu0 0.0
    %935 = vmatprep.subr.mxu0 0.0
    %936 = vmatpush1.msra.mxu0 0.0
    %937 = vmatprep.subr.mxu0 0.0
    %938 = vmatpush1.msra.mxu0 0.0
    %939 = vmatprep.subr.mxu0 0.0
    %940 = vmatpush1.msra.mxu0 0.0
    %941 = vmatprep.subr.mxu0 0.0
    %942 = vmatpush1.msra.mxu0 0.0
    %943 = vmatprep.subr.mxu0 0.0
    %944 = vmatpush1.msra.mxu0 0.0
    %945 = vmatprep.subr.mxu0 0.0
    %946 = vmatpush1.msra.mxu0 0.0
    %947 = vmatprep.subr.mxu0 0.0
    %948 = vmatpush1.msra.mxu0 0.0
    %949 = vmatprep.subr.mxu0 0.0
    %950 = vmatpush1.msra.mxu0 0.0
    %951 = vmatprep.subr.mxu0 0.0
    %952 = vmatpush1.msra.mxu0 0.0
    %953 = vmatprep.subr.mxu0 0.0
    %954 = vmatpush1.msra.mxu0 0.0
    %955 = vmatprep.subr.mxu0 0.0
    %956 = vmatpush1.msra.mxu0 0.0
    %957 = vmatprep.subr.mxu0 0.0
    %958 = vmatpush1.msra.mxu0 0.0
    %959 = vmatprep.subr.mxu0 0.0
    %960 = vmatpush1.msra.mxu0 0.0
    %961 = vmatprep.subr.mxu0 0.0
    %962 = vmatpush1.msra.mxu0 0.0
    %963 = vmatprep.subr.mxu0 0.0
    %964 = vmatpush1.msra.mxu0 0.0
    %965 = vmatprep.subr.mxu0 0.0
    %966 = vmatpush1.msra.mxu0 0.0
    %967 = vmatprep.subr.mxu0 0.0
    %968 = vmatpush1.msra.mxu0 0.0
    %969 = vmatprep.subr.mxu0 0.0
    %970 = vmatpush1.msra.mxu0 0.0
    %971 = vmatprep.subr.mxu0 0.0
    %972 = vmatpush1.msra.mxu0 0.0
    %973 = vmatprep.subr.mxu0 0.0
    %974 = vmatpush1.msra.mxu0 0.0
    %975 = vmatprep.mubr.f32.mxu0 0.0
    %976 = vmatmul.mubr.f32.gmra.mrb[0].mxu0 %v906
    %v977 = vpop.f32.mrb[0].mxu0
    %v978 = vadd.f32 %v902, %v977
    %v979 = vpop.f32.mrb[0].mxu0
    %980 = vmatprep.mubr.f32.mxu0 0.0
    %981 = vmatmul.mubr.f32.gmra.mrb[0].mxu0 %v909
    %v982 = vpop.f32.mrb[0].mxu0
    %v983 = vadd.f32 %v902, %v982
    %v984 = vpop.f32.mrb[0].mxu0
    %985 = vdwg.mxu0
    %v986 = vadd.f32 %v807, %v978
    %v987 = vadd.f32 %v808, %v983
    %v988 = vsel %vm99, %v986, 0.0
    %989 = vadd.xlane.f32.xlu0 %v988
    %v990 = vpop.xlane.xlu0 %989
    %v991 = vsel %vm99, %v987, 0.0
    %992 = vadd.xlane.f32.xlu0 %v991
    %v993 = vpop.xlane.xlu0 %992
    %v994 = vmul.f32 %v990, %v758
    %v995 = vmul.f32 %v993, %v758
    %v996 = vsub.f32 %v986, %v994
    %v997 = vsub.f32 %v987, %v995
    %v998 = vmul.f32 %v996, %v996
    %v999 = vmul.f32 %v997, %v997
    %v1000 = vsel %vm99, %v998, 0.0
    %1001 = vadd.xlane.f32.xlu0 %v1000
    %v1002 = vpop.xlane.xlu0 %1001
    %v1003 = vsel %vm99, %v999, 0.0
    %1004 = vadd.xlane.f32.xlu0 %v1003
    %v1005 = vpop.xlane.xlu0 %1004
    %v1006 = vmul.f32 %v1002, 0.032258064
    %v1007 = vmul.f32 %v1005, 0.032258064
    %v1008 = vrsqrt.pop %v1006
    %v1009 = vmul.f32 %v1006, %v1008
    %vm1010 = vcmp.eq.f32.partialorder %v1006, inf
    %v1011 = vsel %vm1010, %v1006, %v1009
    %vm1012 = vcmp.eq.f32.partialorder %v1006, 0.0
    %v1013 = vand.u32 %v1006, 2147483648
    %v1014 = vsel %vm1012, %v1013, %v1011
    %v1015 = vrsqrt.pop %v1007
    %v1016 = vmul.f32 %v1007, %v1015
    %vm1017 = vcmp.eq.f32.partialorder %v1007, inf
    %v1018 = vsel %vm1017, %v1007, %v1016
    %vm1019 = vcmp.eq.f32.partialorder %v1007, 0.0
    %v1020 = vand.u32 %v1007, 2147483648
    %v1021 = vsel %vm1019, %v1020, %v1018
    %v1023 = vlaneseq
    %v1024 = vshrl.u32 %v1023, 7
    %v1025 = vsub.s32 0, %v1024
    %v1026 = vrot.slane %v86, %v1025
    %v1028 = vmul.f32 %v1026, %v996
    %v1029 = vmul.f32 %v1026, %v997
    %v1030 = vadd.f32 %v1014, 1e-06
    %v1031 = vadd.f32 %v1021, 1e-06
    %v1032 = vrcp.pop %v1030
    %v1033 = vmul.f32 %v1028, %v1032
    %v1034 = vrcp.pop %v1031
    %v1035 = vmul.f32 %v1029, %v1034
    %v1037 = vlaneseq
    %v1038 = vshrl.u32 %v1037, 7
    %v1039 = vsub.s32 0, %v1038
    %v1040 = vrot.slane %v87, %v1039
    %v1042 = vadd.f32 %v1033, %v1040
    %v1043 = vadd.f32 %v1035, %v1040
    %v1045 = vlaneseq
    %v1046 = vshrl.u32 %v1045, 7
    %v1047 = vsub.s32 0, %v1046
    %v1048 = vrot.slane %v92, %v1047
    %v1051 = vsel %vm99, %v1042, 0
    %v1054 = vsel %vm99, %v1043, 0
    %1056 = vmatprep.subr.mxu0 0.0
    %1057 = vmatpush1.msra.mxu0 %v88
    %1058 = vmatprep.subr.mxu0 0.0
    %1059 = vmatpush1.msra.mxu0 %v89
    %1060 = vmatprep.subr.mxu0 0.0
    %1061 = vmatpush1.msra.mxu0 %v90
    %1062 = vmatprep.subr.mxu0 0.0
    %1063 = vmatpush1.msra.mxu0 %v91
    %1064 = vmatprep.subr.mxu0 0.0
    %1065 = vmatpush1.msra.mxu0 0.0
    %1066 = vmatprep.subr.mxu0 0.0
    %1067 = vmatpush1.msra.mxu0 0.0
    %1068 = vmatprep.subr.mxu0 0.0
    %1069 = vmatpush1.msra.mxu0 0.0
    %1070 = vmatprep.subr.mxu0 0.0
    %1071 = vmatpush1.msra.mxu0 0.0
    %1072 = vmatprep.subr.mxu0 0.0
    %1073 = vmatpush1.msra.mxu0 0.0
    %1074 = vmatprep.subr.mxu0 0.0
    %1075 = vmatpush1.msra.mxu0 0.0
    %1076 = vmatprep.subr.mxu0 0.0
    %1077 = vmatpush1.msra.mxu0 0.0
    %1078 = vmatprep.subr.mxu0 0.0
    %1079 = vmatpush1.msra.mxu0 0.0
    %1080 = vmatprep.subr.mxu0 0.0
    %1081 = vmatpush1.msra.mxu0 0.0
    %1082 = vmatprep.subr.mxu0 0.0
    %1083 = vmatpush1.msra.mxu0 0.0
    %1084 = vmatprep.subr.mxu0 0.0
    %1085 = vmatpush1.msra.mxu0 0.0
    %1086 = vmatprep.subr.mxu0 0.0
    %1087 = vmatpush1.msra.mxu0 0.0
    %1088 = vmatprep.subr.mxu0 0.0
    %1089 = vmatpush1.msra.mxu0 0.0
    %1090 = vmatprep.subr.mxu0 0.0
    %1091 = vmatpush1.msra.mxu0 0.0
    %1092 = vmatprep.subr.mxu0 0.0
    %1093 = vmatpush1.msra.mxu0 0.0
    %1094 = vmatprep.subr.mxu0 0.0
    %1095 = vmatpush1.msra.mxu0 0.0
    %1096 = vmatprep.subr.mxu0 0.0
    %1097 = vmatpush1.msra.mxu0 0.0
    %1098 = vmatprep.subr.mxu0 0.0
    %1099 = vmatpush1.msra.mxu0 0.0
    %1100 = vmatprep.subr.mxu0 0.0
    %1101 = vmatpush1.msra.mxu0 0.0
    %1102 = vmatprep.subr.mxu0 0.0
    %1103 = vmatpush1.msra.mxu0 0.0
    %1104 = vmatprep.subr.mxu0 0.0
    %1105 = vmatpush1.msra.mxu0 0.0
    %1106 = vmatprep.subr.mxu0 0.0
    %1107 = vmatpush1.msra.mxu0 0.0
    %1108 = vmatprep.subr.mxu0 0.0
    %1109 = vmatpush1.msra.mxu0 0.0
    %1110 = vmatprep.subr.mxu0 0.0
    %1111 = vmatpush1.msra.mxu0 0.0
    %1112 = vmatprep.subr.mxu0 0.0
    %1113 = vmatpush1.msra.mxu0 0.0
    %1114 = vmatprep.subr.mxu0 0.0
    %1115 = vmatpush1.msra.mxu0 0.0
    %1116 = vmatprep.subr.mxu0 0.0
    %1117 = vmatpush1.msra.mxu0 0.0
    %1118 = vmatprep.subr.mxu0 0.0
    %1119 = vmatpush1.msra.mxu0 0.0
    %1120 = vmatprep.mubr.f32.mxu0 0.0
    %1121 = vmatmul.mubr.f32.gmra.mrb[0].mxu0 %v1051
    %v1122 = vpop.f32.mrb[0].mxu0
    %v1123 = vadd.f32 %v1048, %v1122
    %v1124 = vpop.f32.mrb[0].mxu0
    %1125 = vmatprep.mubr.f32.mxu0 0.0
    %1126 = vmatmul.mubr.f32.gmra.mrb[0].mxu0 %v1054
    %v1127 = vpop.f32.mrb[0].mxu0
    %v1128 = vadd.f32 %v1048, %v1127
    %v1129 = vpop.f32.mrb[0].mxu0
    %1130 = vdwg.mxu0
    %1131 = vst [vmem:[#allocation2] sm:$0xff] %v1123
    %1132 = vst [vmem:[#allocation2 + $0x8] sm:$0xff] %v1128
    %vm1133 = vcmask 253952
    %1134 = vst.msk [vmem:[%s17] sm:$0x1] %vm1133, %v1042
    %s1135 = scalar_lea.vmem %s17, 1
    %1136 = vst.msk [vmem:[%s1135] sm:$0x1] %vm1133, %v1043
    // Predicated region
    $region66: #{bert_forward.1} parent=1 // pred_check
      _
    $region67: #{bert_forward.1} parent=1 // pred_check_branch
      %1138 = sbr.rel (0) target = $region69
    $region68: #{bert_forward.1} parent=1 // pred_region
      %s1140 = ssub.s32 256, 256
      %1141 = vsyncadd [#allocation3], %s1140
      %s1142 = sshll.u32 [#allocation2], 4
      %s1143 = int_to_ptr.vmem [resolvable:$true] %s1142
      %1148 = dma.vmem_to_hbm [thread:$0]  %s1143, 256, %s16, [#allocation3], 128, 128, 8
    $region69: #{bert_forward.1} parent=1 // pred_fallthru
      _
    // Predicated region
    $region70: #{bert_forward.1} parent=1 // pred_check
      _
    $region71: #{bert_forward.1} parent=1 // pred_check_branch
      %1150 = sbr.rel (0) target = $region73
    $region72: #{bert_forward.1} parent=1 // pred_region
      _
    $region73: #{bert_forward.1} parent=1 // pred_fallthru
      _
    // Predicated region
    $region74: #{bert_forward.1} parent=1 // pred_check
      _
    $region75: #{bert_forward.1} parent=1 // pred_check_branch
      %1152 = sbr.rel (0) target = $region77
    $region76: #{bert_forward.1} parent=1 // pred_region
      %1153 = dma.done [#allocation3], 256
    $region77: #{bert_forward.1} parent=1 // pred_fallthru
      _
    // Predicated region
    $region78: #{bert_forward.1} parent=1 // pred_check
      _
    $region79: #{bert_forward.1} parent=1 // pred_check_branch
      %1155 = sbr.rel (0) target = $region81
    $region80: #{bert_forward.1} parent=1 // pred_region
      _
    $region81: #{bert_forward.1} parent=1 // pred_fallthru
      _
    %1156 = vsyncpa [#allocation3], 1

</llo_original>
